<compile_context>
chip_gen: v7x
topology: tpu7x:2x2x1
jax: 0.10.0
libtpu: 0.0.40
codegen_flags: <defaults>
</compile_context>

<pallas_src>
import functools
import numpy as np
import jax
import jax.numpy as jnp
from jax.experimental import pallas as pl
from jax.experimental.pallas import tpu as pltpu  # noqa: F401

# ----- model hyperparameters (small, consistent with the module) -----
EMBEDDING_SIZE = 16
VOCAB_SIZE = 50
WORD_HIDDEN = 16          # word_hidden_size, word_layers = 1
SENT_HIDDEN = 16          # sentence_hidden_size, sentence_layers = 1
IMG_SIZE = 32
IMGS_NUM = 4
IMG_HIDDEN = 16           # img_hidden_size
NUM_CLASSES = 2           # ClassificationOutputLayer width
WORD_OUT = 2 * WORD_HIDDEN
SENT_OUT = 2 * SENT_HIDDEN
FC_SIZE = SENT_OUT + IMG_HIDDEN
OUT_PAD = 128             # lane-dense classifier output width


def _round_up(n, m):
    return (n + m - 1) // m * m


# ----------------------------------------------------------------------
# In-kernel fused bidirectional GRU recurrence (fwd + bwd chains in one carry).
# gi_all already contains the full input projection + b_ih + (r,z parts of b_hh).
# ----------------------------------------------------------------------
def _gru_recurrence(gi_all, m_cat, w_hh, b_hh_n, T, B):
    """Returns last hidden states [B, 2H] = [h_fwd | h_bwd].

    gi_all: [T*B, 6H]  gate-interleaved columns [r_f r_b z_f z_b n_f n_b];
                       row t*B+b holds the fwd input at time t and bwd input at T-1-t.
    m_cat:  [T*B, 2H]  row t*B+b = [mask(t,b)*1_H | mask(T-1-t,b)*1_H]
    w_hh:   [2H, 6H]   block-diagonal over direction, gate-interleaved columns.
    b_hh_n: [1, 2H]    n-gate hidden bias (the only part that must stay per-step).
    """
    H2 = m_cat.shape[-1]                       # 2*H (combined hidden width)
    h = jnp.zeros((B, H2), jnp.float32)        # [h_f | h_b], register-carried
    for t in range(T):                         # fully unrolled; both chains interleaved
        gi = gi_all[t * B:(t + 1) * B, :]
        m = m_cat[t * B:(t + 1) * B, :]
        gh = jnp.dot(h, w_hh, preferred_element_type=jnp.float32)
        rz = jax.nn.sigmoid(gi[:, :2 * H2] + gh[:, :2 * H2])   # one EUP push for r and z
        r = rz[:, :H2]
        z = rz[:, H2:]
        n = jnp.tanh(gi[:, 2 * H2:] + r * (gh[:, 2 * H2:] + b_hh_n))
        # h_next = m*((1-z)*n + z*h) + (1-m)*h  ==  h + m*(1-z)*(n-h)
        h = h + (m * (1.0 - z)) * (n - h)
    return h


# ----------------------------------------------------------------------
# Single fused Pallas kernel for the whole forward pass
# ----------------------------------------------------------------------
# TODO(synk): ClassificationOutputLayer internals are not provided; implemented as a
#             single Linear(fc_size, NUM_CLASSES) producing logits.
def fused_forward_kernel(xf_ref, xr_ref, mw_ref, wihwf_ref, wihwb_ref, bihw_ref,
                         whhw_ref, bhhwn_ref,
                         sel_ref, selr_ref, ms_ref, wihsf_ref, wihsb_ref, bihs_ref,
                         whhs_ref, bhhsn_ref,
                         imgs_ref, pool_ref, imgw_ref, imgb_ref,
                         fcws_ref, fcwi_ref, fcb_ref, out_ref):
    S_pad = sel_ref.shape[1]
    T_w = xf_ref.shape[0] // S_pad
    D_pad = out_ref.shape[0]
    max_sents = sel_ref.shape[0] // D_pad

    # ---- word-level BiGRU: hoisted input projection (no lane concat), then recurrence ----
    gi_w = (jnp.dot(xf_ref[...], wihwf_ref[...], preferred_element_type=jnp.float32)
            + jnp.dot(xr_ref[...], wihwb_ref[...], preferred_element_type=jnp.float32)
            + bihw_ref[...])                                                       # [T_w*S_pad, 6WH]
    word_hn = _gru_recurrence(gi_w, mw_ref[...], whhw_ref[...], bhhwn_ref[...],
                              T_w, S_pad)                                          # [S_pad, 2WH]

    # ---- SentencePaddingLayer + sentence-GRU input projection, all as MXU matmuls ----
    p_fwd = jnp.dot(sel_ref[...], word_hn, preferred_element_type=jnp.float32)     # [MS*D_pad, 2WH]
    p_rev = jnp.dot(selr_ref[...], word_hn, preferred_element_type=jnp.float32)    # [MS*D_pad, 2WH]
    gi_s = (jnp.dot(p_fwd, wihsf_ref[...], preferred_element_type=jnp.float32)
            + jnp.dot(p_rev, wihsb_ref[...], preferred_element_type=jnp.float32)
            + bihs_ref[...])                                                       # [MS*D_pad, 6SH]
    sent_hn = _gru_recurrence(gi_s, ms_ref[...], whhs_ref[...], bhhsn_ref[...],
                              max_sents, D_pad)                                    # [D_pad, 2SH]

    # ---- image encoder: Linear + ReLU + AvgPool(IMGS_NUM) as a pooling matmul ----
    y = jnp.dot(imgs_ref[...], imgw_ref[...], preferred_element_type=jnp.float32) + imgb_ref[...]
    y = jnp.maximum(y, 0.0)                                                        # [D_pad*N, IMG_H]
    img_feat = jnp.dot(pool_ref[...], y, preferred_element_type=jnp.float32)       # [D_pad, IMG_H]

    # ---- classification Linear (fc_w split -> no lane concat), lane-dense full store ----
    out_ref[...] = (jnp.dot(sent_hn, fcws_ref[...], preferred_element_type=jnp.float32)
                    + jnp.dot(img_feat, fcwi_ref[...], preferred_element_type=jnp.float32)
                    + fcb_ref[...])


# ----------------------------------------------------------------------
# Wrapper-side layout plumbing (combined weights, masks, selection matrices)
# ----------------------------------------------------------------------
def _combine_bigru_params(p, H):
    """Gate-interleaved combined GRU weights, split per input direction, b_hh folded.

    Returns (w_ih_f, w_ih_b, b_in, w_hh, b_hh_n):
      w_ih_f/w_ih_b: [in, 6H]  fwd/bwd input rows -> their direction's columns only.
      b_in:          [1, 6H]   b_ih with the r/z halves of b_hh folded in.
      w_hh:          [2H, 6H]  block-diagonal over direction.
      b_hh_n:        [1, 2H]   n-gate hidden bias (stays inside r*(.) per step).
    """
    def ig(wf, wb):  # [rows,3H] x2 -> [rows,6H] with columns [r_f r_b z_f z_b n_f n_b]
        return jnp.concatenate([wf[:, 0:H], wb[:, 0:H],
                                wf[:, H:2 * H], wb[:, H:2 * H],
                                wf[:, 2 * H:3 * H], wb[:, 2 * H:3 * H]], axis=-1)
    in_size = p['w_ih_f'].shape[0]
    zi = jnp.zeros((in_size, 3 * H), jnp.float32)
    zh = jnp.zeros((H, 3 * H), jnp.float32)
    w_ih_f = ig(p['w_ih_f'], zi)                                                  # [in, 6H]
    w_ih_b = ig(zi, p['w_ih_b'])                                                  # [in, 6H]
    w_hh = jnp.concatenate([ig(p['w_hh_f'], zh), ig(zh, p['w_hh_b'])], axis=0)    # [2H, 6H]
    b_ih = ig(p['b_ih_f'], p['b_ih_b'])                                           # [1, 6H]
    b_hh = ig(p['b_hh_f'], p['b_hh_b'])                                           # [1, 6H]
    b_in = jnp.concatenate([b_ih[:, :4 * H] + b_hh[:, :4 * H], b_ih[:, 4 * H:]], axis=-1)
    b_hh_n = b_hh[:, 4 * H:]                                                      # [1, 2H]
    return w_ih_f, w_ih_b, b_in, w_hh, b_hh_n


def _bigru_mask(lens, T, B_pad, H):
    """[T*B_pad, 2H] pre-broadcast mask: [mask(t,b)*1_H | mask(T-1-t,b)*1_H]."""
    lens_p = jnp.pad(lens.astype(jnp.int32), (0, B_pad - lens.shape[0]))
    t_idx = np.arange(T, dtype=np.int32)
    m_fwd = (t_idx[:, None] < lens_p[None, :]).astype(jnp.float32)                # [T, B_pad]
    m_rev = m_fwd[::-1]
    return jnp.concatenate(
        [jnp.broadcast_to(m_fwd[:, :, None], (T, B_pad, H)),
         jnp.broadcast_to(m_rev[:, :, None], (T, B_pad, H))],
        axis=-1).reshape(T * B_pad, 2 * H)


@functools.partial(jax.jit, static_argnums=(5,))
def model_forward(params, padding_text, lens, sents_num, imgs, max_sents):
    S, T_w = padding_text.shape
    D = sents_num.shape[0]
    S_pad = _round_up(S, 8)
    D_pad = _round_up(D, 8)

    # embedding lookup (integer gather) kept in JAX glue
    # TODO(synk): could be folded into the kernel as a one-hot [T*S_pad,VOCAB] matmul
    #             against (embedding @ w_ih) to make the whole forward a single launch.
    emb = params['embedding'][padding_text].astype(jnp.float32)                   # [S, T_w, E]

    # word-GRU inputs: time-major fwd and time-reversed flats (no lane concat) + mask
    emb_p = jnp.pad(emb, ((0, S_pad - S), (0, 0), (0, 0)))
    x_fwd = jnp.transpose(emb_p, (1, 0, 2))                                       # [T_w, S_pad, E]
    xf = x_fwd.reshape(T_w * S_pad, EMBEDDING_SIZE)
    xr = x_fwd[::-1].reshape(T_w * S_pad, EMBEDDING_SIZE)
    mw = _bigru_mask(lens, T_w, S_pad, WORD_HIDDEN)

    # sentence-GRU mask
    ms = _bigru_mask(sents_num, max_sents, D_pad, SENT_HIDDEN)

    # one-hot selection matrices for SentencePaddingLayer (time-major rows t*D_pad + d),
    # fwd time order and reversed time order (for the bwd chain)
    sents_p = jnp.pad(sents_num.astype(jnp.int32), (0, D_pad - D))
    offsets = jnp.concatenate([jnp.zeros((1,), jnp.int32),
                               jnp.cumsum(sents_num.astype(jnp.int32))[:-1]])
    offsets_p = jnp.pad(offsets, (0, D_pad - D))
    t_s = np.arange(max_sents, dtype=np.int32)[:, None]                           # [MS, 1]
    valid = t_s < sents_p[None, :]                                                # [MS, D_pad]
    col = jnp.where(valid, offsets_p[None, :] + t_s, S_pad)                       # sentinel -> zero row
    sel3 = (col[:, :, None] == np.arange(S_pad, dtype=np.int32)[None, None, :]
            ).astype(jnp.float32)                                                 # [MS, D_pad, S_pad]
    sel = sel3.reshape(max_sents * D_pad, S_pad)
    sel_rev = sel3[::-1].reshape(max_sents * D_pad, S_pad)

    # combined GRU weights (b_hh r/z folded into the input bias)
    wihwf, wihwb, bihw, whhw, bhhwn = _combine_bigru_params(params['word_gru'], WORD_HIDDEN)
    wihsf, wihsb, bihs, whhs, bhhsn = _combine_bigru_params(params['sent_gru'], SENT_HIDDEN)

    # images: flatten to 2-D; AvgPool over IMGS_NUM as a [D_pad, D_pad*N] matmul (np constant)
    imgs_p = jnp.pad(imgs.astype(jnp.float32),
                     ((0, D_pad - D), (0, 0), (0, 0))).reshape(D_pad * IMGS_NUM, IMG_SIZE)
    pool = jnp.asarray(np.repeat(np.eye(D_pad, dtype=np.float32), IMGS_NUM, axis=1)
                       / float(IMGS_NUM))                                         # [D_pad, D_pad*N]

    # FC split (no lane concat in kernel) and padded to 128 lanes for a dense store
    pad_c = OUT_PAD - NUM_CLASSES
    fcw_s = jnp.pad(params['fc_w'][:SENT_OUT], ((0, 0), (0, pad_c)))
    fcw_i = jnp.pad(params['fc_w'][SENT_OUT:], ((0, 0), (0, pad_c)))
    fcb = jnp.pad(params['fc_b'], ((0, 0), (0, pad_c)))

    out = pl.pallas_call(
        fused_forward_kernel,
        out_shape=jax.ShapeDtypeStruct((D_pad, OUT_PAD), jnp.float32),
    )(xf, xr, mw, wihwf, wihwb, bihw, whhw, bhhwn,
      sel, sel_rev, ms, wihsf, wihsb, bihs, whhs, bhhsn,
      imgs_p, pool, params['img_w'], params['img_b'],
      fcw_s, fcw_i, fcb)
    return out[:D, :NUM_CLASSES]                                                  # drop padding


# ----------------------------------------------------------------------
# Pure-JAX reference (for correctness check)
# ----------------------------------------------------------------------
def _gru_step(h, x_t, m, w_ih, w_hh, b_ih, b_hh):
    H = h.shape[-1]
    gi = jnp.dot(x_t, w_ih) + b_ih
    gh = jnp.dot(h, w_hh) + b_hh
    r = jax.nn.sigmoid(gi[:, :H] + gh[:, :H])
    z = jax.nn.sigmoid(gi[:, H:2 * H] + gh[:, H:2 * H])
    n = jnp.tanh(gi[:, 2 * H:] + r * gh[:, 2 * H:])
    h_new = (1.0 - z) * n + z * h
    return m * h_new + (1.0 - m) * h


def ref_bigru(x_bte, lens, p, hidden):
    B, T, _ = x_bte.shape
    mask = (jnp.arange(T)[None, :] < lens[:, None]).astype(jnp.float32)
    hf = jnp.zeros((B, hidden), jnp.float32)
    hb = jnp.zeros((B, hidden), jnp.float32)
    for t in range(T):
        hf = _gru_step(hf, x_bte[:, t, :], mask[:, t][:, None],
                       p['w_ih_f'], p['w_hh_f'], p['b_ih_f'], p['b_hh_f'])
    for t in range(T - 1, -1, -1):
        hb = _gru_step(hb, x_bte[:, t, :], mask[:, t][:, None],
                       p['w_ih_b'], p['w_hh_b'], p['b_ih_b'], p['b_hh_b'])
    return jnp.concatenate([hf, hb], axis=-1)


def sentence_padding_ref(word_hn, sents_num, max_sents):
    num_docs = int(sents_num.shape[0])
    total = word_hn.shape[0]
    offsets = jnp.concatenate(
        [jnp.zeros((1,), jnp.int32), jnp.cumsum(sents_num)[:-1].astype(jnp.int32)])
    docs = []
    for d in range(num_docs):
        rows = []
        for s in range(max_sents):
            idx = jnp.minimum(offsets[d] + s, total - 1)
            valid = (s < sents_num[d]).astype(jnp.float32)
            rows.append(valid * word_hn[idx])
        docs.append(jnp.stack(rows))
    return jnp.stack(docs)                                                        # [D, MS, WORD_OUT]


def ref_forward(params, padding_text, lens, sents_num, imgs, max_sents):
    emb = params['embedding'][padding_text]
    word_hn = ref_bigru(emb, lens, params['word_gru'], WORD_HIDDEN)
    padded = sentence_padding_ref(word_hn, sents_num, max_sents)
    sent_hn = ref_bigru(padded, sents_num, params['sent_gru'], SENT_HIDDEN)
    y = jnp.einsum('dns,sh->dnh', imgs, params['img_w']) + params['img_b']
    y = jnp.maximum(y, 0.0)
    img_feat = jnp.mean(y, axis=1)
    fc_in = jnp.concatenate([sent_hn, img_feat], axis=1)
    return jnp.dot(fc_in, params['fc_w']) + params['fc_b']


# ----------------------------------------------------------------------
# Deterministic parameter init
# ----------------------------------------------------------------------
def _gru_params(key, in_size, hidden):
    ks = jax.random.split(key, 8)
    s = 0.1
    return {
        'w_ih_f': s * jax.random.normal(ks[0], (in_size, 3 * hidden), jnp.float32),
        'w_hh_f': s * jax.random.normal(ks[1], (hidden, 3 * hidden), jnp.float32),
        'b_ih_f': s * jax.random.normal(ks[2], (1, 3 * hidden), jnp.float32),
        'b_hh_f': s * jax.random.normal(ks[3], (1, 3 * hidden), jnp.float32),
        'w_ih_b': s * jax.random.normal(ks[4], (in_size, 3 * hidden), jnp.float32),
        'w_hh_b': s * jax.random.normal(ks[5], (hidden, 3 * hidden), jnp.float32),
        'b_ih_b': s * jax.random.normal(ks[6], (1, 3 * hidden), jnp.float32),
        'b_hh_b': s * jax.random.normal(ks[7], (1, 3 * hidden), jnp.float32),
    }


def init_params(key):
    ks = jax.random.split(key, 6)
    return {
        'embedding': 0.1 * jax.random.normal(ks[0], (VOCAB_SIZE, EMBEDDING_SIZE), jnp.float32),
        'word_gru': _gru_params(ks[1], EMBEDDING_SIZE, WORD_HIDDEN),
        'sent_gru': _gru_params(ks[2], WORD_OUT, SENT_HIDDEN),
        'img_w': 0.1 * jax.random.normal(ks[3], (IMG_SIZE, IMG_HIDDEN), jnp.float32),
        'img_b': 0.1 * jax.random.normal(ks[4], (1, IMG_HIDDEN), jnp.float32),
        'fc_w': 0.1 * jax.random.normal(ks[5], (FC_SIZE, NUM_CLASSES), jnp.float32),
        'fc_b': jnp.zeros((1, NUM_CLASSES), jnp.float32),
    }


if __name__ == "__main__":
    key = jax.random.PRNGKey(0)
    k_param, k_text, k_img = jax.random.split(key, 3)

    # inputs: 2 docs, sents_num=[3,2] -> 5 sentences total, max 8 words each
    num_docs = 2
    max_sents = 3
    total_sents = 5
    max_words = 8

    padding_text = jax.random.randint(k_text, (total_sents, max_words), 0, VOCAB_SIZE, jnp.int32)
    lens = jnp.array([8, 5, 3, 6, 2], jnp.int32)          # words per sentence (all > 0)
    sents_num = jnp.array([3, 2], jnp.int32)              # sentences per doc (all > 0)
    imgs = jax.random.normal(k_img, (num_docs, IMGS_NUM, IMG_SIZE), jnp.float32)

    params = init_params(k_param)

    out = model_forward(params, padding_text, lens, sents_num, imgs, max_sents)
    out = jax.block_until_ready(out)

    ref = ref_forward(params, padding_text, lens, sents_num, imgs, max_sents)
    np.testing.assert_allclose(np.asarray(out), np.asarray(ref), atol=1e-4, rtol=1e-4)

    print("KERNEL_OK")
</pallas_src>

<mosaic_0001>
module attributes {stable_mosaic.version = 11 : i64} {
  func.func @fused_forward_kernel(%arg0: memref<64x16xf32, #tpu.memory_space<vmem>>, %arg1: memref<64x16xf32, #tpu.memory_space<vmem>>, %arg2: memref<64x32xf32, #tpu.memory_space<vmem>>, %arg3: memref<16x96xf32, #tpu.memory_space<vmem>>, %arg4: memref<16x96xf32, #tpu.memory_space<vmem>>, %arg5: memref<1x96xf32, #tpu.memory_space<vmem>>, %arg6: memref<32x96xf32, #tpu.memory_space<vmem>>, %arg7: memref<1x32xf32, #tpu.memory_space<vmem>>, %arg8: memref<24x8xf32, #tpu.memory_space<vmem>>, %arg9: memref<24x8xf32, #tpu.memory_space<vmem>>, %arg10: memref<24x32xf32, #tpu.memory_space<vmem>>, %arg11: memref<32x96xf32, #tpu.memory_space<vmem>>, %arg12: memref<32x96xf32, #tpu.memory_space<vmem>>, %arg13: memref<1x96xf32, #tpu.memory_space<vmem>>, %arg14: memref<32x96xf32, #tpu.memory_space<vmem>>, %arg15: memref<1x32xf32, #tpu.memory_space<vmem>>, %arg16: memref<32x32xf32, #tpu.memory_space<vmem>>, %arg17: memref<8x32xf32, #tpu.memory_space<vmem>>, %arg18: memref<32x16xf32, #tpu.memory_space<vmem>>, %arg19: memref<1x16xf32, #tpu.memory_space<vmem>>, %arg20: memref<32x128xf32, #tpu.memory_space<vmem>>, %arg21: memref<16x128xf32, #tpu.memory_space<vmem>>, %arg22: memref<1x128xf32, #tpu.memory_space<vmem>>, %arg23: memref<8x128xf32, #tpu.memory_space<vmem>>) attributes {dimension_semantics = [], scalar_prefetch = 0 : i64, scratch_operands = 0 : i64, tpu.core_type = #tpu.core_type<tc>} {
    %c0 = arith.constant 0 : index
    %c0_0 = arith.constant 0 : index
    %0 = vector.load %arg0[%c0, %c0_0] : memref<64x16xf32, #tpu.memory_space<vmem>>, vector<64x16xf32>
    %c0_1 = arith.constant 0 : index
    %c0_2 = arith.constant 0 : index
    %1 = vector.load %arg3[%c0_1, %c0_2] : memref<16x96xf32, #tpu.memory_space<vmem>>, vector<16x96xf32>
    %cst = arith.constant dense<0.000000e+00> : vector<64x96xf32>
    %2 = tpu.matmul %0, %1, %cst {dimension_numbers = #tpu.dot_dimension_numbers<[1], [0], [0], [1], [0, 0, 1, 1], [], []>} : vector<64x16xf32>, vector<16x96xf32>, vector<64x96xf32> -> vector<64x96xf32>
    %c0_3 = arith.constant 0 : index
    %c0_4 = arith.constant 0 : index
    %3 = vector.load %arg1[%c0_3, %c0_4] : memref<64x16xf32, #tpu.memory_space<vmem>>, vector<64x16xf32>
    %c0_5 = arith.constant 0 : index
    %c0_6 = arith.constant 0 : index
    %4 = vector.load %arg4[%c0_5, %c0_6] : memref<16x96xf32, #tpu.memory_space<vmem>>, vector<16x96xf32>
    %cst_7 = arith.constant dense<0.000000e+00> : vector<64x96xf32>
    %5 = tpu.matmul %3, %4, %cst_7 {dimension_numbers = #tpu.dot_dimension_numbers<[1], [0], [0], [1], [0, 0, 1, 1], [], []>} : vector<64x16xf32>, vector<16x96xf32>, vector<64x96xf32> -> vector<64x96xf32>
    %6 = arith.addf %2, %5 : vector<64x96xf32>
    %c0_8 = arith.constant 0 : index
    %c0_9 = arith.constant 0 : index
    %7 = vector.load %arg5[%c0_8, %c0_9] : memref<1x96xf32, #tpu.memory_space<vmem>>, vector<1x96xf32>
    %8 = vector.broadcast %7 : vector<1x96xf32> to vector<64x96xf32>
    %9 = arith.addf %6, %8 : vector<64x96xf32>
    %c0_10 = arith.constant 0 : index
    %c0_11 = arith.constant 0 : index
    %10 = vector.load %arg2[%c0_10, %c0_11] : memref<64x32xf32, #tpu.memory_space<vmem>>, vector<64x32xf32>
    %c0_12 = arith.constant 0 : index
    %c0_13 = arith.constant 0 : index
    %11 = vector.load %arg6[%c0_12, %c0_13] : memref<32x96xf32, #tpu.memory_space<vmem>>, vector<32x96xf32>
    %c0_14 = arith.constant 0 : index
    %c0_15 = arith.constant 0 : index
    %12 = vector.load %arg7[%c0_14, %c0_15] : memref<1x32xf32, #tpu.memory_space<vmem>>, vector<1x32xf32>
    %cst_16 = arith.constant 0.000000e+00 : f32
    %13 = vector.broadcast %cst_16 : f32 to vector<8x32xf32>
    %14 = vector.extract_strided_slice %9 {offsets = [0, 0], sizes = [8, 96], strides = [1, 1]} : vector<64x96xf32> to vector<8x96xf32>
    %15 = vector.extract_strided_slice %10 {offsets = [0, 0], sizes = [8, 32], strides = [1, 1]} : vector<64x32xf32> to vector<8x32xf32>
    %cst_17 = arith.constant dense<0.000000e+00> : vector<8x96xf32>
    %16 = tpu.matmul %13, %11, %cst_17 {dimension_numbers = #tpu.dot_dimension_numbers<[1], [0], [0], [1], [0, 0, 1, 1], [], []>} : vector<8x32xf32>, vector<32x96xf32>, vector<8x96xf32> -> vector<8x96xf32>
    %17 = vector.extract_strided_slice %14 {offsets = [0, 0], sizes = [8, 64], strides = [1, 1]} : vector<8x96xf32> to vector<8x64xf32>
    %18 = vector.extract_strided_slice %16 {offsets = [0, 0], sizes = [8, 64], strides = [1, 1]} : vector<8x96xf32> to vector<8x64xf32>
    %19 = arith.addf %17, %18 : vector<8x64xf32>
    %20 = arith.negf %19 : vector<8x64xf32>
    %21 = math.exp %20 : vector<8x64xf32>
    %cst_18 = arith.constant 1.000000e+00 : f32
    %22 = vector.broadcast %cst_18 : f32 to vector<8x64xf32>
    %23 = arith.addf %22, %21 : vector<8x64xf32>
    %24 = arith.divf %22, %23 : vector<8x64xf32>
    %25 = vector.extract_strided_slice %24 {offsets = [0, 0], sizes = [8, 32], strides = [1, 1]} : vector<8x64xf32> to vector<8x32xf32>
    %26 = vector.extract_strided_slice %24 {offsets = [0, 32], sizes = [8, 32], strides = [1, 1]} : vector<8x64xf32> to vector<8x32xf32>
    %27 = vector.extract_strided_slice %14 {offsets = [0, 64], sizes = [8, 32], strides = [1, 1]} : vector<8x96xf32> to vector<8x32xf32>
    %28 = vector.extract_strided_slice %16 {offsets = [0, 64], sizes = [8, 32], strides = [1, 1]} : vector<8x96xf32> to vector<8x32xf32>
    %29 = vector.broadcast %12 : vector<1x32xf32> to vector<8x32xf32>
    %30 = arith.addf %28, %29 : vector<8x32xf32>
    %31 = arith.mulf %25, %30 : vector<8x32xf32>
    %32 = arith.addf %27, %31 : vector<8x32xf32>
    %33 = math.tanh %32 : vector<8x32xf32>
    %cst_19 = arith.constant 1.000000e+00 : f32
    %34 = vector.broadcast %cst_19 : f32 to vector<8x32xf32>
    %35 = arith.subf %34, %26 : vector<8x32xf32>
    %36 = arith.mulf %15, %35 : vector<8x32xf32>
    %37 = arith.subf %33, %13 : vector<8x32xf32>
    %38 = arith.mulf %36, %37 : vector<8x32xf32>
    %39 = arith.addf %13, %38 : vector<8x32xf32>
    %40 = vector.extract_strided_slice %9 {offsets = [8, 0], sizes = [8, 96], strides = [1, 1]} : vector<64x96xf32> to vector<8x96xf32>
    %41 = vector.extract_strided_slice %10 {offsets = [8, 0], sizes = [8, 32], strides = [1, 1]} : vector<64x32xf32> to vector<8x32xf32>
    %cst_20 = arith.constant dense<0.000000e+00> : vector<8x96xf32>
    %42 = tpu.matmul %39, %11, %cst_20 {dimension_numbers = #tpu.dot_dimension_numbers<[1], [0], [0], [1], [0, 0, 1, 1], [], []>} : vector<8x32xf32>, vector<32x96xf32>, vector<8x96xf32> -> vector<8x96xf32>
    %43 = vector.extract_strided_slice %40 {offsets = [0, 0], sizes = [8, 64], strides = [1, 1]} : vector<8x96xf32> to vector<8x64xf32>
    %44 = vector.extract_strided_slice %42 {offsets = [0, 0], sizes = [8, 64], strides = [1, 1]} : vector<8x96xf32> to vector<8x64xf32>
    %45 = arith.addf %43, %44 : vector<8x64xf32>
    %46 = arith.negf %45 : vector<8x64xf32>
    %47 = math.exp %46 : vector<8x64xf32>
    %cst_21 = arith.constant 1.000000e+00 : f32
    %48 = vector.broadcast %cst_21 : f32 to vector<8x64xf32>
    %49 = arith.addf %48, %47 : vector<8x64xf32>
    %50 = arith.divf %48, %49 : vector<8x64xf32>
    %51 = vector.extract_strided_slice %50 {offsets = [0, 0], sizes = [8, 32], strides = [1, 1]} : vector<8x64xf32> to vector<8x32xf32>
    %52 = vector.extract_strided_slice %50 {offsets = [0, 32], sizes = [8, 32], strides = [1, 1]} : vector<8x64xf32> to vector<8x32xf32>
    %53 = vector.extract_strided_slice %40 {offsets = [0, 64], sizes = [8, 32], strides = [1, 1]} : vector<8x96xf32> to vector<8x32xf32>
    %54 = vector.extract_strided_slice %42 {offsets = [0, 64], sizes = [8, 32], strides = [1, 1]} : vector<8x96xf32> to vector<8x32xf32>
    %55 = vector.broadcast %12 : vector<1x32xf32> to vector<8x32xf32>
    %56 = arith.addf %54, %55 : vector<8x32xf32>
    %57 = arith.mulf %51, %56 : vector<8x32xf32>
    %58 = arith.addf %53, %57 : vector<8x32xf32>
    %59 = math.tanh %58 : vector<8x32xf32>
    %cst_22 = arith.constant 1.000000e+00 : f32
    %60 = vector.broadcast %cst_22 : f32 to vector<8x32xf32>
    %61 = arith.subf %60, %52 : vector<8x32xf32>
    %62 = arith.mulf %41, %61 : vector<8x32xf32>
    %63 = arith.subf %59, %39 : vector<8x32xf32>
    %64 = arith.mulf %62, %63 : vector<8x32xf32>
    %65 = arith.addf %39, %64 : vector<8x32xf32>
    %66 = vector.extract_strided_slice %9 {offsets = [16, 0], sizes = [8, 96], strides = [1, 1]} : vector<64x96xf32> to vector<8x96xf32>
    %67 = vector.extract_strided_slice %10 {offsets = [16, 0], sizes = [8, 32], strides = [1, 1]} : vector<64x32xf32> to vector<8x32xf32>
    %cst_23 = arith.constant dense<0.000000e+00> : vector<8x96xf32>
    %68 = tpu.matmul %65, %11, %cst_23 {dimension_numbers = #tpu.dot_dimension_numbers<[1], [0], [0], [1], [0, 0, 1, 1], [], []>} : vector<8x32xf32>, vector<32x96xf32>, vector<8x96xf32> -> vector<8x96xf32>
    %69 = vector.extract_strided_slice %66 {offsets = [0, 0], sizes = [8, 64], strides = [1, 1]} : vector<8x96xf32> to vector<8x64xf32>
    %70 = vector.extract_strided_slice %68 {offsets = [0, 0], sizes = [8, 64], strides = [1, 1]} : vector<8x96xf32> to vector<8x64xf32>
    %71 = arith.addf %69, %70 : vector<8x64xf32>
    %72 = arith.negf %71 : vector<8x64xf32>
    %73 = math.exp %72 : vector<8x64xf32>
    %cst_24 = arith.constant 1.000000e+00 : f32
    %74 = vector.broadcast %cst_24 : f32 to vector<8x64xf32>
    %75 = arith.addf %74, %73 : vector<8x64xf32>
    %76 = arith.divf %74, %75 : vector<8x64xf32>
    %77 = vector.extract_strided_slice %76 {offsets = [0, 0], sizes = [8, 32], strides = [1, 1]} : vector<8x64xf32> to vector<8x32xf32>
    %78 = vector.extract_strided_slice %76 {offsets = [0, 32], sizes = [8, 32], strides = [1, 1]} : vector<8x64xf32> to vector<8x32xf32>
    %79 = vector.extract_strided_slice %66 {offsets = [0, 64], sizes = [8, 32], strides = [1, 1]} : vector<8x96xf32> to vector<8x32xf32>
    %80 = vector.extract_strided_slice %68 {offsets = [0, 64], sizes = [8, 32], strides = [1, 1]} : vector<8x96xf32> to vector<8x32xf32>
    %81 = vector.broadcast %12 : vector<1x32xf32> to vector<8x32xf32>
    %82 = arith.addf %80, %81 : vector<8x32xf32>
    %83 = arith.mulf %77, %82 : vector<8x32xf32>
    %84 = arith.addf %79, %83 : vector<8x32xf32>
    %85 = math.tanh %84 : vector<8x32xf32>
    %cst_25 = arith.constant 1.000000e+00 : f32
    %86 = vector.broadcast %cst_25 : f32 to vector<8x32xf32>
    %87 = arith.subf %86, %78 : vector<8x32xf32>
    %88 = arith.mulf %67, %87 : vector<8x32xf32>
    %89 = arith.subf %85, %65 : vector<8x32xf32>
    %90 = arith.mulf %88, %89 : vector<8x32xf32>
    %91 = arith.addf %65, %90 : vector<8x32xf32>
    %92 = vector.extract_strided_slice %9 {offsets = [24, 0], sizes = [8, 96], strides = [1, 1]} : vector<64x96xf32> to vector<8x96xf32>
    %93 = vector.extract_strided_slice %10 {offsets = [24, 0], sizes = [8, 32], strides = [1, 1]} : vector<64x32xf32> to vector<8x32xf32>
    %cst_26 = arith.constant dense<0.000000e+00> : vector<8x96xf32>
    %94 = tpu.matmul %91, %11, %cst_26 {dimension_numbers = #tpu.dot_dimension_numbers<[1], [0], [0], [1], [0, 0, 1, 1], [], []>} : vector<8x32xf32>, vector<32x96xf32>, vector<8x96xf32> -> vector<8x96xf32>
    %95 = vector.extract_strided_slice %92 {offsets = [0, 0], sizes = [8, 64], strides = [1, 1]} : vector<8x96xf32> to vector<8x64xf32>
    %96 = vector.extract_strided_slice %94 {offsets = [0, 0], sizes = [8, 64], strides = [1, 1]} : vector<8x96xf32> to vector<8x64xf32>
    %97 = arith.addf %95, %96 : vector<8x64xf32>
    %98 = arith.negf %97 : vector<8x64xf32>
    %99 = math.exp %98 : vector<8x64xf32>
    %cst_27 = arith.constant 1.000000e+00 : f32
    %100 = vector.broadcast %cst_27 : f32 to vector<8x64xf32>
    %101 = arith.addf %100, %99 : vector<8x64xf32>
    %102 = arith.divf %100, %101 : vector<8x64xf32>
    %103 = vector.extract_strided_slice %102 {offsets = [0, 0], sizes = [8, 32], strides = [1, 1]} : vector<8x64xf32> to vector<8x32xf32>
    %104 = vector.extract_strided_slice %102 {offsets = [0, 32], sizes = [8, 32], strides = [1, 1]} : vector<8x64xf32> to vector<8x32xf32>
    %105 = vector.extract_strided_slice %92 {offsets = [0, 64], sizes = [8, 32], strides = [1, 1]} : vector<8x96xf32> to vector<8x32xf32>
    %106 = vector.extract_strided_slice %94 {offsets = [0, 64], sizes = [8, 32], strides = [1, 1]} : vector<8x96xf32> to vector<8x32xf32>
    %107 = vector.broadcast %12 : vector<1x32xf32> to vector<8x32xf32>
    %108 = arith.addf %106, %107 : vector<8x32xf32>
    %109 = arith.mulf %103, %108 : vector<8x32xf32>
    %110 = arith.addf %105, %109 : vector<8x32xf32>
    %111 = math.tanh %110 : vector<8x32xf32>
    %cst_28 = arith.constant 1.000000e+00 : f32
    %112 = vector.broadcast %cst_28 : f32 to vector<8x32xf32>
    %113 = arith.subf %112, %104 : vector<8x32xf32>
    %114 = arith.mulf %93, %113 : vector<8x32xf32>
    %115 = arith.subf %111, %91 : vector<8x32xf32>
    %116 = arith.mulf %114, %115 : vector<8x32xf32>
    %117 = arith.addf %91, %116 : vector<8x32xf32>
    %118 = vector.extract_strided_slice %9 {offsets = [32, 0], sizes = [8, 96], strides = [1, 1]} : vector<64x96xf32> to vector<8x96xf32>
    %119 = vector.extract_strided_slice %10 {offsets = [32, 0], sizes = [8, 32], strides = [1, 1]} : vector<64x32xf32> to vector<8x32xf32>
    %cst_29 = arith.constant dense<0.000000e+00> : vector<8x96xf32>
    %120 = tpu.matmul %117, %11, %cst_29 {dimension_numbers = #tpu.dot_dimension_numbers<[1], [0], [0], [1], [0, 0, 1, 1], [], []>} : vector<8x32xf32>, vector<32x96xf32>, vector<8x96xf32> -> vector<8x96xf32>
    %121 = vector.extract_strided_slice %118 {offsets = [0, 0], sizes = [8, 64], strides = [1, 1]} : vector<8x96xf32> to vector<8x64xf32>
    %122 = vector.extract_strided_slice %120 {offsets = [0, 0], sizes = [8, 64], strides = [1, 1]} : vector<8x96xf32> to vector<8x64xf32>
    %123 = arith.addf %121, %122 : vector<8x64xf32>
    %124 = arith.negf %123 : vector<8x64xf32>
    %125 = math.exp %124 : vector<8x64xf32>
    %cst_30 = arith.constant 1.000000e+00 : f32
    %126 = vector.broadcast %cst_30 : f32 to vector<8x64xf32>
    %127 = arith.addf %126, %125 : vector<8x64xf32>
    %128 = arith.divf %126, %127 : vector<8x64xf32>
    %129 = vector.extract_strided_slice %128 {offsets = [0, 0], sizes = [8, 32], strides = [1, 1]} : vector<8x64xf32> to vector<8x32xf32>
    %130 = vector.extract_strided_slice %128 {offsets = [0, 32], sizes = [8, 32], strides = [1, 1]} : vector<8x64xf32> to vector<8x32xf32>
    %131 = vector.extract_strided_slice %118 {offsets = [0, 64], sizes = [8, 32], strides = [1, 1]} : vector<8x96xf32> to vector<8x32xf32>
    %132 = vector.extract_strided_slice %120 {offsets = [0, 64], sizes = [8, 32], strides = [1, 1]} : vector<8x96xf32> to vector<8x32xf32>
    %133 = vector.broadcast %12 : vector<1x32xf32> to vector<8x32xf32>
    %134 = arith.addf %132, %133 : vector<8x32xf32>
    %135 = arith.mulf %129, %134 : vector<8x32xf32>
    %136 = arith.addf %131, %135 : vector<8x32xf32>
    %137 = math.tanh %136 : vector<8x32xf32>
    %cst_31 = arith.constant 1.000000e+00 : f32
    %138 = vector.broadcast %cst_31 : f32 to vector<8x32xf32>
    %139 = arith.subf %138, %130 : vector<8x32xf32>
    %140 = arith.mulf %119, %139 : vector<8x32xf32>
    %141 = arith.subf %137, %117 : vector<8x32xf32>
    %142 = arith.mulf %140, %141 : vector<8x32xf32>
    %143 = arith.addf %117, %142 : vector<8x32xf32>
    %144 = vector.extract_strided_slice %9 {offsets = [40, 0], sizes = [8, 96], strides = [1, 1]} : vector<64x96xf32> to vector<8x96xf32>
    %145 = vector.extract_strided_slice %10 {offsets = [40, 0], sizes = [8, 32], strides = [1, 1]} : vector<64x32xf32> to vector<8x32xf32>
    %cst_32 = arith.constant dense<0.000000e+00> : vector<8x96xf32>
    %146 = tpu.matmul %143, %11, %cst_32 {dimension_numbers = #tpu.dot_dimension_numbers<[1], [0], [0], [1], [0, 0, 1, 1], [], []>} : vector<8x32xf32>, vector<32x96xf32>, vector<8x96xf32> -> vector<8x96xf32>
    %147 = vector.extract_strided_slice %144 {offsets = [0, 0], sizes = [8, 64], strides = [1, 1]} : vector<8x96xf32> to vector<8x64xf32>
    %148 = vector.extract_strided_slice %146 {offsets = [0, 0], sizes = [8, 64], strides = [1, 1]} : vector<8x96xf32> to vector<8x64xf32>
    %149 = arith.addf %147, %148 : vector<8x64xf32>
    %150 = arith.negf %149 : vector<8x64xf32>
    %151 = math.exp %150 : vector<8x64xf32>
    %cst_33 = arith.constant 1.000000e+00 : f32
    %152 = vector.broadcast %cst_33 : f32 to vector<8x64xf32>
    %153 = arith.addf %152, %151 : vector<8x64xf32>
    %154 = arith.divf %152, %153 : vector<8x64xf32>
    %155 = vector.extract_strided_slice %154 {offsets = [0, 0], sizes = [8, 32], strides = [1, 1]} : vector<8x64xf32> to vector<8x32xf32>
    %156 = vector.extract_strided_slice %154 {offsets = [0, 32], sizes = [8, 32], strides = [1, 1]} : vector<8x64xf32> to vector<8x32xf32>
    %157 = vector.extract_strided_slice %144 {offsets = [0, 64], sizes = [8, 32], strides = [1, 1]} : vector<8x96xf32> to vector<8x32xf32>
    %158 = vector.extract_strided_slice %146 {offsets = [0, 64], sizes = [8, 32], strides = [1, 1]} : vector<8x96xf32> to vector<8x32xf32>
    %159 = vector.broadcast %12 : vector<1x32xf32> to vector<8x32xf32>
    %160 = arith.addf %158, %159 : vector<8x32xf32>
    %161 = arith.mulf %155, %160 : vector<8x32xf32>
    %162 = arith.addf %157, %161 : vector<8x32xf32>
    %163 = math.tanh %162 : vector<8x32xf32>
    %cst_34 = arith.constant 1.000000e+00 : f32
    %164 = vector.broadcast %cst_34 : f32 to vector<8x32xf32>
    %165 = arith.subf %164, %156 : vector<8x32xf32>
    %166 = arith.mulf %145, %165 : vector<8x32xf32>
    %167 = arith.subf %163, %143 : vector<8x32xf32>
    %168 = arith.mulf %166, %167 : vector<8x32xf32>
    %169 = arith.addf %143, %168 : vector<8x32xf32>
    %170 = vector.extract_strided_slice %9 {offsets = [48, 0], sizes = [8, 96], strides = [1, 1]} : vector<64x96xf32> to vector<8x96xf32>
    %171 = vector.extract_strided_slice %10 {offsets = [48, 0], sizes = [8, 32], strides = [1, 1]} : vector<64x32xf32> to vector<8x32xf32>
    %cst_35 = arith.constant dense<0.000000e+00> : vector<8x96xf32>
    %172 = tpu.matmul %169, %11, %cst_35 {dimension_numbers = #tpu.dot_dimension_numbers<[1], [0], [0], [1], [0, 0, 1, 1], [], []>} : vector<8x32xf32>, vector<32x96xf32>, vector<8x96xf32> -> vector<8x96xf32>
    %173 = vector.extract_strided_slice %170 {offsets = [0, 0], sizes = [8, 64], strides = [1, 1]} : vector<8x96xf32> to vector<8x64xf32>
    %174 = vector.extract_strided_slice %172 {offsets = [0, 0], sizes = [8, 64], strides = [1, 1]} : vector<8x96xf32> to vector<8x64xf32>
    %175 = arith.addf %173, %174 : vector<8x64xf32>
    %176 = arith.negf %175 : vector<8x64xf32>
    %177 = math.exp %176 : vector<8x64xf32>
    %cst_36 = arith.constant 1.000000e+00 : f32
    %178 = vector.broadcast %cst_36 : f32 to vector<8x64xf32>
    %179 = arith.addf %178, %177 : vector<8x64xf32>
    %180 = arith.divf %178, %179 : vector<8x64xf32>
    %181 = vector.extract_strided_slice %180 {offsets = [0, 0], sizes = [8, 32], strides = [1, 1]} : vector<8x64xf32> to vector<8x32xf32>
    %182 = vector.extract_strided_slice %180 {offsets = [0, 32], sizes = [8, 32], strides = [1, 1]} : vector<8x64xf32> to vector<8x32xf32>
    %183 = vector.extract_strided_slice %170 {offsets = [0, 64], sizes = [8, 32], strides = [1, 1]} : vector<8x96xf32> to vector<8x32xf32>
    %184 = vector.extract_strided_slice %172 {offsets = [0, 64], sizes = [8, 32], strides = [1, 1]} : vector<8x96xf32> to vector<8x32xf32>
    %185 = vector.broadcast %12 : vector<1x32xf32> to vector<8x32xf32>
    %186 = arith.addf %184, %185 : vector<8x32xf32>
    %187 = arith.mulf %181, %186 : vector<8x32xf32>
    %188 = arith.addf %183, %187 : vector<8x32xf32>
    %189 = math.tanh %188 : vector<8x32xf32>
    %cst_37 = arith.constant 1.000000e+00 : f32
    %190 = vector.broadcast %cst_37 : f32 to vector<8x32xf32>
    %191 = arith.subf %190, %182 : vector<8x32xf32>
    %192 = arith.mulf %171, %191 : vector<8x32xf32>
    %193 = arith.subf %189, %169 : vector<8x32xf32>
    %194 = arith.mulf %192, %193 : vector<8x32xf32>
    %195 = arith.addf %169, %194 : vector<8x32xf32>
    %196 = vector.extract_strided_slice %9 {offsets = [56, 0], sizes = [8, 96], strides = [1, 1]} : vector<64x96xf32> to vector<8x96xf32>
    %197 = vector.extract_strided_slice %10 {offsets = [56, 0], sizes = [8, 32], strides = [1, 1]} : vector<64x32xf32> to vector<8x32xf32>
    %cst_38 = arith.constant dense<0.000000e+00> : vector<8x96xf32>
    %198 = tpu.matmul %195, %11, %cst_38 {dimension_numbers = #tpu.dot_dimension_numbers<[1], [0], [0], [1], [0, 0, 1, 1], [], []>} : vector<8x32xf32>, vector<32x96xf32>, vector<8x96xf32> -> vector<8x96xf32>
    %199 = vector.extract_strided_slice %196 {offsets = [0, 0], sizes = [8, 64], strides = [1, 1]} : vector<8x96xf32> to vector<8x64xf32>
    %200 = vector.extract_strided_slice %198 {offsets = [0, 0], sizes = [8, 64], strides = [1, 1]} : vector<8x96xf32> to vector<8x64xf32>
    %201 = arith.addf %199, %200 : vector<8x64xf32>
    %202 = arith.negf %201 : vector<8x64xf32>
    %203 = math.exp %202 : vector<8x64xf32>
    %cst_39 = arith.constant 1.000000e+00 : f32
    %204 = vector.broadcast %cst_39 : f32 to vector<8x64xf32>
    %205 = arith.addf %204, %203 : vector<8x64xf32>
    %206 = arith.divf %204, %205 : vector<8x64xf32>
    %207 = vector.extract_strided_slice %206 {offsets = [0, 0], sizes = [8, 32], strides = [1, 1]} : vector<8x64xf32> to vector<8x32xf32>
    %208 = vector.extract_strided_slice %206 {offsets = [0, 32], sizes = [8, 32], strides = [1, 1]} : vector<8x64xf32> to vector<8x32xf32>
    %209 = vector.extract_strided_slice %196 {offsets = [0, 64], sizes = [8, 32], strides = [1, 1]} : vector<8x96xf32> to vector<8x32xf32>
    %210 = vector.extract_strided_slice %198 {offsets = [0, 64], sizes = [8, 32], strides = [1, 1]} : vector<8x96xf32> to vector<8x32xf32>
    %211 = vector.broadcast %12 : vector<1x32xf32> to vector<8x32xf32>
    %212 = arith.addf %210, %211 : vector<8x32xf32>
    %213 = arith.mulf %207, %212 : vector<8x32xf32>
    %214 = arith.addf %209, %213 : vector<8x32xf32>
    %215 = math.tanh %214 : vector<8x32xf32>
    %cst_40 = arith.constant 1.000000e+00 : f32
    %216 = vector.broadcast %cst_40 : f32 to vector<8x32xf32>
    %217 = arith.subf %216, %208 : vector<8x32xf32>
    %218 = arith.mulf %197, %217 : vector<8x32xf32>
    %219 = arith.subf %215, %195 : vector<8x32xf32>
    %220 = arith.mulf %218, %219 : vector<8x32xf32>
    %221 = arith.addf %195, %220 : vector<8x32xf32>
    %c0_41 = arith.constant 0 : index
    %c0_42 = arith.constant 0 : index
    %222 = vector.load %arg8[%c0_41, %c0_42] : memref<24x8xf32, #tpu.memory_space<vmem>>, vector<24x8xf32>
    %cst_43 = arith.constant dense<0.000000e+00> : vector<24x32xf32>
    %223 = tpu.matmul %222, %221, %cst_43 {dimension_numbers = #tpu.dot_dimension_numbers<[1], [0], [0], [1], [0, 0, 1, 1], [], []>} : vector<24x8xf32>, vector<8x32xf32>, vector<24x32xf32> -> vector<24x32xf32>
    %c0_44 = arith.constant 0 : index
    %c0_45 = arith.constant 0 : index
    %224 = vector.load %arg9[%c0_44, %c0_45] : memref<24x8xf32, #tpu.memory_space<vmem>>, vector<24x8xf32>
    %cst_46 = arith.constant dense<0.000000e+00> : vector<24x32xf32>
    %225 = tpu.matmul %224, %221, %cst_46 {dimension_numbers = #tpu.dot_dimension_numbers<[1], [0], [0], [1], [0, 0, 1, 1], [], []>} : vector<24x8xf32>, vector<8x32xf32>, vector<24x32xf32> -> vector<24x32xf32>
    %c0_47 = arith.constant 0 : index
    %c0_48 = arith.constant 0 : index
    %226 = vector.load %arg11[%c0_47, %c0_48] : memref<32x96xf32, #tpu.memory_space<vmem>>, vector<32x96xf32>
    %cst_49 = arith.constant dense<0.000000e+00> : vector<24x96xf32>
    %227 = tpu.matmul %223, %226, %cst_49 {dimension_numbers = #tpu.dot_dimension_numbers<[1], [0], [0], [1], [0, 0, 1, 1], [], []>} : vector<24x32xf32>, vector<32x96xf32>, vector<24x96xf32> -> vector<24x96xf32>
    %c0_50 = arith.constant 0 : index
    %c0_51 = arith.constant 0 : index
    %228 = vector.load %arg12[%c0_50, %c0_51] : memref<32x96xf32, #tpu.memory_space<vmem>>, vector<32x96xf32>
    %cst_52 = arith.constant dense<0.000000e+00> : vector<24x96xf32>
    %229 = tpu.matmul %225, %228, %cst_52 {dimension_numbers = #tpu.dot_dimension_numbers<[1], [0], [0], [1], [0, 0, 1, 1], [], []>} : vector<24x32xf32>, vector<32x96xf32>, vector<24x96xf32> -> vector<24x96xf32>
    %230 = arith.addf %227, %229 : vector<24x96xf32>
    %c0_53 = arith.constant 0 : index
    %c0_54 = arith.constant 0 : index
    %231 = vector.load %arg13[%c0_53, %c0_54] : memref<1x96xf32, #tpu.memory_space<vmem>>, vector<1x96xf32>
    %232 = vector.broadcast %231 : vector<1x96xf32> to vector<24x96xf32>
    %233 = arith.addf %230, %232 : vector<24x96xf32>
    %c0_55 = arith.constant 0 : index
    %c0_56 = arith.constant 0 : index
    %234 = vector.load %arg10[%c0_55, %c0_56] : memref<24x32xf32, #tpu.memory_space<vmem>>, vector<24x32xf32>
    %c0_57 = arith.constant 0 : index
    %c0_58 = arith.constant 0 : index
    %235 = vector.load %arg14[%c0_57, %c0_58] : memref<32x96xf32, #tpu.memory_space<vmem>>, vector<32x96xf32>
    %c0_59 = arith.constant 0 : index
    %c0_60 = arith.constant 0 : index
    %236 = vector.load %arg15[%c0_59, %c0_60] : memref<1x32xf32, #tpu.memory_space<vmem>>, vector<1x32xf32>
    %cst_61 = arith.constant 0.000000e+00 : f32
    %237 = vector.broadcast %cst_61 : f32 to vector<8x32xf32>
    %238 = vector.extract_strided_slice %233 {offsets = [0, 0], sizes = [8, 96], strides = [1, 1]} : vector<24x96xf32> to vector<8x96xf32>
    %239 = vector.extract_strided_slice %234 {offsets = [0, 0], sizes = [8, 32], strides = [1, 1]} : vector<24x32xf32> to vector<8x32xf32>
    %cst_62 = arith.constant dense<0.000000e+00> : vector<8x96xf32>
    %240 = tpu.matmul %237, %235, %cst_62 {dimension_numbers = #tpu.dot_dimension_numbers<[1], [0], [0], [1], [0, 0, 1, 1], [], []>} : vector<8x32xf32>, vector<32x96xf32>, vector<8x96xf32> -> vector<8x96xf32>
    %241 = vector.extract_strided_slice %238 {offsets = [0, 0], sizes = [8, 64], strides = [1, 1]} : vector<8x96xf32> to vector<8x64xf32>
    %242 = vector.extract_strided_slice %240 {offsets = [0, 0], sizes = [8, 64], strides = [1, 1]} : vector<8x96xf32> to vector<8x64xf32>
    %243 = arith.addf %241, %242 : vector<8x64xf32>
    %244 = arith.negf %243 : vector<8x64xf32>
    %245 = math.exp %244 : vector<8x64xf32>
    %cst_63 = arith.constant 1.000000e+00 : f32
    %246 = vector.broadcast %cst_63 : f32 to vector<8x64xf32>
    %247 = arith.addf %246, %245 : vector<8x64xf32>
    %248 = arith.divf %246, %247 : vector<8x64xf32>
    %249 = vector.extract_strided_slice %248 {offsets = [0, 0], sizes = [8, 32], strides = [1, 1]} : vector<8x64xf32> to vector<8x32xf32>
    %250 = vector.extract_strided_slice %248 {offsets = [0, 32], sizes = [8, 32], strides = [1, 1]} : vector<8x64xf32> to vector<8x32xf32>
    %251 = vector.extract_strided_slice %238 {offsets = [0, 64], sizes = [8, 32], strides = [1, 1]} : vector<8x96xf32> to vector<8x32xf32>
    %252 = vector.extract_strided_slice %240 {offsets = [0, 64], sizes = [8, 32], strides = [1, 1]} : vector<8x96xf32> to vector<8x32xf32>
    %253 = vector.broadcast %236 : vector<1x32xf32> to vector<8x32xf32>
    %254 = arith.addf %252, %253 : vector<8x32xf32>
    %255 = arith.mulf %249, %254 : vector<8x32xf32>
    %256 = arith.addf %251, %255 : vector<8x32xf32>
    %257 = math.tanh %256 : vector<8x32xf32>
    %cst_64 = arith.constant 1.000000e+00 : f32
    %258 = vector.broadcast %cst_64 : f32 to vector<8x32xf32>
    %259 = arith.subf %258, %250 : vector<8x32xf32>
    %260 = arith.mulf %239, %259 : vector<8x32xf32>
    %261 = arith.subf %257, %237 : vector<8x32xf32>
    %262 = arith.mulf %260, %261 : vector<8x32xf32>
    %263 = arith.addf %237, %262 : vector<8x32xf32>
    %264 = vector.extract_strided_slice %233 {offsets = [8, 0], sizes = [8, 96], strides = [1, 1]} : vector<24x96xf32> to vector<8x96xf32>
    %265 = vector.extract_strided_slice %234 {offsets = [8, 0], sizes = [8, 32], strides = [1, 1]} : vector<24x32xf32> to vector<8x32xf32>
    %cst_65 = arith.constant dense<0.000000e+00> : vector<8x96xf32>
    %266 = tpu.matmul %263, %235, %cst_65 {dimension_numbers = #tpu.dot_dimension_numbers<[1], [0], [0], [1], [0, 0, 1, 1], [], []>} : vector<8x32xf32>, vector<32x96xf32>, vector<8x96xf32> -> vector<8x96xf32>
    %267 = vector.extract_strided_slice %264 {offsets = [0, 0], sizes = [8, 64], strides = [1, 1]} : vector<8x96xf32> to vector<8x64xf32>
    %268 = vector.extract_strided_slice %266 {offsets = [0, 0], sizes = [8, 64], strides = [1, 1]} : vector<8x96xf32> to vector<8x64xf32>
    %269 = arith.addf %267, %268 : vector<8x64xf32>
    %270 = arith.negf %269 : vector<8x64xf32>
    %271 = math.exp %270 : vector<8x64xf32>
    %cst_66 = arith.constant 1.000000e+00 : f32
    %272 = vector.broadcast %cst_66 : f32 to vector<8x64xf32>
    %273 = arith.addf %272, %271 : vector<8x64xf32>
    %274 = arith.divf %272, %273 : vector<8x64xf32>
    %275 = vector.extract_strided_slice %274 {offsets = [0, 0], sizes = [8, 32], strides = [1, 1]} : vector<8x64xf32> to vector<8x32xf32>
    %276 = vector.extract_strided_slice %274 {offsets = [0, 32], sizes = [8, 32], strides = [1, 1]} : vector<8x64xf32> to vector<8x32xf32>
    %277 = vector.extract_strided_slice %264 {offsets = [0, 64], sizes = [8, 32], strides = [1, 1]} : vector<8x96xf32> to vector<8x32xf32>
    %278 = vector.extract_strided_slice %266 {offsets = [0, 64], sizes = [8, 32], strides = [1, 1]} : vector<8x96xf32> to vector<8x32xf32>
    %279 = vector.broadcast %236 : vector<1x32xf32> to vector<8x32xf32>
    %280 = arith.addf %278, %279 : vector<8x32xf32>
    %281 = arith.mulf %275, %280 : vector<8x32xf32>
    %282 = arith.addf %277, %281 : vector<8x32xf32>
    %283 = math.tanh %282 : vector<8x32xf32>
    %cst_67 = arith.constant 1.000000e+00 : f32
    %284 = vector.broadcast %cst_67 : f32 to vector<8x32xf32>
    %285 = arith.subf %284, %276 : vector<8x32xf32>
    %286 = arith.mulf %265, %285 : vector<8x32xf32>
    %287 = arith.subf %283, %263 : vector<8x32xf32>
    %288 = arith.mulf %286, %287 : vector<8x32xf32>
    %289 = arith.addf %263, %288 : vector<8x32xf32>
    %290 = vector.extract_strided_slice %233 {offsets = [16, 0], sizes = [8, 96], strides = [1, 1]} : vector<24x96xf32> to vector<8x96xf32>
    %291 = vector.extract_strided_slice %234 {offsets = [16, 0], sizes = [8, 32], strides = [1, 1]} : vector<24x32xf32> to vector<8x32xf32>
    %cst_68 = arith.constant dense<0.000000e+00> : vector<8x96xf32>
    %292 = tpu.matmul %289, %235, %cst_68 {dimension_numbers = #tpu.dot_dimension_numbers<[1], [0], [0], [1], [0, 0, 1, 1], [], []>} : vector<8x32xf32>, vector<32x96xf32>, vector<8x96xf32> -> vector<8x96xf32>
    %293 = vector.extract_strided_slice %290 {offsets = [0, 0], sizes = [8, 64], strides = [1, 1]} : vector<8x96xf32> to vector<8x64xf32>
    %294 = vector.extract_strided_slice %292 {offsets = [0, 0], sizes = [8, 64], strides = [1, 1]} : vector<8x96xf32> to vector<8x64xf32>
    %295 = arith.addf %293, %294 : vector<8x64xf32>
    %296 = arith.negf %295 : vector<8x64xf32>
    %297 = math.exp %296 : vector<8x64xf32>
    %cst_69 = arith.constant 1.000000e+00 : f32
    %298 = vector.broadcast %cst_69 : f32 to vector<8x64xf32>
    %299 = arith.addf %298, %297 : vector<8x64xf32>
    %300 = arith.divf %298, %299 : vector<8x64xf32>
    %301 = vector.extract_strided_slice %300 {offsets = [0, 0], sizes = [8, 32], strides = [1, 1]} : vector<8x64xf32> to vector<8x32xf32>
    %302 = vector.extract_strided_slice %300 {offsets = [0, 32], sizes = [8, 32], strides = [1, 1]} : vector<8x64xf32> to vector<8x32xf32>
    %303 = vector.extract_strided_slice %290 {offsets = [0, 64], sizes = [8, 32], strides = [1, 1]} : vector<8x96xf32> to vector<8x32xf32>
    %304 = vector.extract_strided_slice %292 {offsets = [0, 64], sizes = [8, 32], strides = [1, 1]} : vector<8x96xf32> to vector<8x32xf32>
    %305 = vector.broadcast %236 : vector<1x32xf32> to vector<8x32xf32>
    %306 = arith.addf %304, %305 : vector<8x32xf32>
    %307 = arith.mulf %301, %306 : vector<8x32xf32>
    %308 = arith.addf %303, %307 : vector<8x32xf32>
    %309 = math.tanh %308 : vector<8x32xf32>
    %cst_70 = arith.constant 1.000000e+00 : f32
    %310 = vector.broadcast %cst_70 : f32 to vector<8x32xf32>
    %311 = arith.subf %310, %302 : vector<8x32xf32>
    %312 = arith.mulf %291, %311 : vector<8x32xf32>
    %313 = arith.subf %309, %289 : vector<8x32xf32>
    %314 = arith.mulf %312, %313 : vector<8x32xf32>
    %315 = arith.addf %289, %314 : vector<8x32xf32>
    %c0_71 = arith.constant 0 : index
    %c0_72 = arith.constant 0 : index
    %316 = vector.load %arg16[%c0_71, %c0_72] : memref<32x32xf32, #tpu.memory_space<vmem>>, vector<32x32xf32>
    %c0_73 = arith.constant 0 : index
    %c0_74 = arith.constant 0 : index
    %317 = vector.load %arg18[%c0_73, %c0_74] : memref<32x16xf32, #tpu.memory_space<vmem>>, vector<32x16xf32>
    %cst_75 = arith.constant dense<0.000000e+00> : vector<32x16xf32>
    %318 = tpu.matmul %316, %317, %cst_75 {dimension_numbers = #tpu.dot_dimension_numbers<[1], [0], [0], [1], [0, 0, 1, 1], [], []>} : vector<32x32xf32>, vector<32x16xf32>, vector<32x16xf32> -> vector<32x16xf32>
    %c0_76 = arith.constant 0 : index
    %c0_77 = arith.constant 0 : index
    %319 = vector.load %arg19[%c0_76, %c0_77] : memref<1x16xf32, #tpu.memory_space<vmem>>, vector<1x16xf32>
    %320 = vector.broadcast %319 : vector<1x16xf32> to vector<32x16xf32>
    %321 = arith.addf %318, %320 : vector<32x16xf32>
    %cst_78 = arith.constant 0.000000e+00 : f32
    %322 = vector.broadcast %cst_78 : f32 to vector<32x16xf32>
    %323 = arith.maximumf %321, %322 : vector<32x16xf32>
    %c0_79 = arith.constant 0 : index
    %c0_80 = arith.constant 0 : index
    %324 = vector.load %arg17[%c0_79, %c0_80] : memref<8x32xf32, #tpu.memory_space<vmem>>, vector<8x32xf32>
    %cst_81 = arith.constant dense<0.000000e+00> : vector<8x16xf32>
    %325 = tpu.matmul %324, %323, %cst_81 {dimension_numbers = #tpu.dot_dimension_numbers<[1], [0], [0], [1], [0, 0, 1, 1], [], []>} : vector<8x32xf32>, vector<32x16xf32>, vector<8x16xf32> -> vector<8x16xf32>
    %c0_82 = arith.constant 0 : index
    %c0_83 = arith.constant 0 : index
    %326 = vector.load %arg20[%c0_82, %c0_83] : memref<32x128xf32, #tpu.memory_space<vmem>>, vector<32x128xf32>
    %cst_84 = arith.constant dense<0.000000e+00> : vector<8x128xf32>
    %327 = tpu.matmul %315, %326, %cst_84 {dimension_numbers = #tpu.dot_dimension_numbers<[1], [0], [0], [1], [0, 0, 1, 1], [], []>} : vector<8x32xf32>, vector<32x128xf32>, vector<8x128xf32> -> vector<8x128xf32>
    %c0_85 = arith.constant 0 : index
    %c0_86 = arith.constant 0 : index
    %328 = vector.load %arg21[%c0_85, %c0_86] : memref<16x128xf32, #tpu.memory_space<vmem>>, vector<16x128xf32>
    %cst_87 = arith.constant dense<0.000000e+00> : vector<8x128xf32>
    %329 = tpu.matmul %325, %328, %cst_87 {dimension_numbers = #tpu.dot_dimension_numbers<[1], [0], [0], [1], [0, 0, 1, 1], [], []>} : vector<8x16xf32>, vector<16x128xf32>, vector<8x128xf32> -> vector<8x128xf32>
    %330 = arith.addf %327, %329 : vector<8x128xf32>
    %c0_88 = arith.constant 0 : index
    %c0_89 = arith.constant 0 : index
    %331 = vector.load %arg22[%c0_88, %c0_89] : memref<1x128xf32, #tpu.memory_space<vmem>>, vector<1x128xf32>
    %332 = vector.broadcast %331 : vector<1x128xf32> to vector<8x128xf32>
    %333 = arith.addf %330, %332 : vector<8x128xf32>
    %c0_90 = arith.constant 0 : index
    %c0_91 = arith.constant 0 : index
    %334 = vector.load %arg23[%c0_90, %c0_91] : memref<8x128xf32, #tpu.memory_space<vmem>>, vector<8x128xf32>
    tpu.vector_store %arg23[%c0_90, %c0_91], %333 {strides = array<i32>} : memref<8x128xf32, #tpu.memory_space<vmem>>, vector<8x128xf32>,
    return
  }
}

</mosaic_0001>

<llo_original>
// kernel: model_forward.1
$region0: #{model_forward.1}
  #allocation0 [shape = 'u32[]', space=smem, size = 0x4, offset = 0x4, fixed_abs, tag = 'smem constant byte address 0x4 - core index']
  #allocation1 [shape = 'u32[144,128]{1,0:T(1,128)}', space=vmem, size = 0x12000, scoped, tag = 'internal scratch']
  %s0 = inlined_call_operand.vmem [shape: f32[64,16], index: 0, kind: input, shape index: {}]
  %s1 = inlined_call_operand.vmem [shape: f32[64,16], index: 1, kind: input, shape index: {}]
  %s2 = inlined_call_operand.vmem [shape: f32[64,32], index: 2, kind: input, shape index: {}]
  %s3 = inlined_call_operand.vmem [shape: f32[16,96], index: 3, kind: input, shape index: {}]
  %s4 = inlined_call_operand.vmem [shape: f32[16,96], index: 4, kind: input, shape index: {}]
  %s5 = inlined_call_operand.vmem [shape: f32[1,96], index: 5, kind: input, shape index: {}]
  %s6 = inlined_call_operand.vmem [shape: f32[32,96], index: 6, kind: input, shape index: {}]
  %s7 = inlined_call_operand.vmem [shape: f32[1,32], index: 7, kind: input, shape index: {}]
  %s8 = inlined_call_operand.vmem [shape: f32[24,8], index: 8, kind: input, shape index: {}]
  %s9 = inlined_call_operand.vmem [shape: f32[24,8], index: 9, kind: input, shape index: {}]
  %s10 = inlined_call_operand.vmem [shape: f32[24,32], index: 10, kind: input, shape index: {}]
  %s11 = inlined_call_operand.vmem [shape: f32[32,96], index: 11, kind: input, shape index: {}]
  %s12 = inlined_call_operand.vmem [shape: f32[32,96], index: 12, kind: input, shape index: {}]
  %s13 = inlined_call_operand.vmem [shape: f32[1,96], index: 13, kind: input, shape index: {}]
  %s14 = inlined_call_operand.vmem [shape: f32[32,96], index: 14, kind: input, shape index: {}]
  %s15 = inlined_call_operand.vmem [shape: f32[1,32], index: 15, kind: input, shape index: {}]
  %s16 = inlined_call_operand.vmem [shape: f32[32,32], index: 16, kind: input, shape index: {}]
  %s17 = inlined_call_operand.vmem [shape: f32[8,32], index: 17, kind: input, shape index: {}]
  %s18 = inlined_call_operand.vmem [shape: f32[32,16], index: 18, kind: input, shape index: {}]
  %s19 = inlined_call_operand.vmem [shape: f32[1,16], index: 19, kind: input, shape index: {}]
  %s20 = inlined_call_operand.vmem [shape: f32[32,128], index: 20, kind: input, shape index: {}]
  %s21 = inlined_call_operand.vmem [shape: f32[16,128], index: 21, kind: input, shape index: {}]
  %s22 = inlined_call_operand.vmem [shape: f32[1,128], index: 22, kind: input, shape index: {}]
  %s23 = inlined_call_operand.vmem [shape: f32[8,128], index: 23, kind: output, shape index: {}]
  %s24 = sld [smem:[#allocation0]]
  $region102: #{model_forward.1} parent=0
    _
  %s26 = ssub.s32 1, %s24
  %s27 = scalar_select 0, %s26, %s24
  // Predicated region
  $region2: #{model_forward.1} parent=0 // pred_check
    _
  $region3: #{model_forward.1} parent=0 // pred_check_branch
    %29 = sbr.rel (0) target = $region5
  $region4: #{model_forward.1} parent=0 // pred_region
    _
  $region5: #{model_forward.1} parent=0 // pred_fallthru
    _
  // Predicated region
  $region6: #{model_forward.1} parent=0 // pred_check
    _
  $region7: #{model_forward.1} parent=0 // pred_check_branch
    %31 = sbr.rel (0) target = $region9
  $region8: #{model_forward.1} parent=0 // pred_region
    _
  $region9: #{model_forward.1} parent=0 // pred_fallthru
    _
  // Predicated region
  $region10: #{model_forward.1} parent=0 // pred_check
    _
  $region11: #{model_forward.1} parent=0 // pred_check_branch
    %33 = sbr.rel (0) target = $region13
  $region12: #{model_forward.1} parent=0 // pred_region
    _
  $region13: #{model_forward.1} parent=0 // pred_fallthru
    _
  // Predicated region
  $region14: #{model_forward.1} parent=0 // pred_check
    _
  $region15: #{model_forward.1} parent=0 // pred_check_branch
    %35 = sbr.rel (0) target = $region17
  $region16: #{model_forward.1} parent=0 // pred_region
    _
  $region17: #{model_forward.1} parent=0 // pred_fallthru
    _
  // Predicated region
  $region18: #{model_forward.1} parent=0 // pred_check
    _
  $region19: #{model_forward.1} parent=0 // pred_check_branch
    %37 = sbr.rel (0) target = $region21
  $region20: #{model_forward.1} parent=0 // pred_region
    _
  $region21: #{model_forward.1} parent=0 // pred_fallthru
    _
  // Predicated region
  $region22: #{model_forward.1} parent=0 // pred_check
    _
  $region23: #{model_forward.1} parent=0 // pred_check_branch
    %39 = sbr.rel (0) target = $region25
  $region24: #{model_forward.1} parent=0 // pred_region
    _
  $region25: #{model_forward.1} parent=0 // pred_fallthru
    _
  // Predicated region
  $region26: #{model_forward.1} parent=0 // pred_check
    _
  $region27: #{model_forward.1} parent=0 // pred_check_branch
    %41 = sbr.rel (0) target = $region29
  $region28: #{model_forward.1} parent=0 // pred_region
    _
  $region29: #{model_forward.1} parent=0 // pred_fallthru
    _
  // Predicated region
  $region30: #{model_forward.1} parent=0 // pred_check
    _
  $region31: #{model_forward.1} parent=0 // pred_check_branch
    %43 = sbr.rel (0) target = $region33
  $region32: #{model_forward.1} parent=0 // pred_region
    _
  $region33: #{model_forward.1} parent=0 // pred_fallthru
    _
  // Predicated region
  $region34: #{model_forward.1} parent=0 // pred_check
    _
  $region35: #{model_forward.1} parent=0 // pred_check_branch
    %45 = sbr.rel (0) target = $region37
  $region36: #{model_forward.1} parent=0 // pred_region
    _
  $region37: #{model_forward.1} parent=0 // pred_fallthru
    _
  // Predicated region
  $region38: #{model_forward.1} parent=0 // pred_check
    _
  $region39: #{model_forward.1} parent=0 // pred_check_branch
    %47 = sbr.rel (0) target = $region41
  $region40: #{model_forward.1} parent=0 // pred_region
    _
  $region41: #{model_forward.1} parent=0 // pred_fallthru
    _
  // Predicated region
  $region42: #{model_forward.1} parent=0 // pred_check
    _
  $region43: #{model_forward.1} parent=0 // pred_check_branch
    %49 = sbr.rel (0) target = $region45
  $region44: #{model_forward.1} parent=0 // pred_region
    _
  $region45: #{model_forward.1} parent=0 // pred_fallthru
    _
  // Predicated region
  $region46: #{model_forward.1} parent=0 // pred_check
    _
  $region47: #{model_forward.1} parent=0 // pred_check_branch
    %51 = sbr.rel (0) target = $region49
  $region48: #{model_forward.1} parent=0 // pred_region
    _
  $region49: #{model_forward.1} parent=0 // pred_fallthru
    _
  // Predicated region
  $region50: #{model_forward.1} parent=0 // pred_check
    _
  $region51: #{model_forward.1} parent=0 // pred_check_branch
    %53 = sbr.rel (0) target = $region53
  $region52: #{model_forward.1} parent=0 // pred_region
    _
  $region53: #{model_forward.1} parent=0 // pred_fallthru
    _
  // Predicated region
  $region54: #{model_forward.1} parent=0 // pred_check
    _
  $region55: #{model_forward.1} parent=0 // pred_check_branch
    %55 = sbr.rel (0) target = $region57
  $region56: #{model_forward.1} parent=0 // pred_region
    _
  $region57: #{model_forward.1} parent=0 // pred_fallthru
    _
  // Predicated region
  $region58: #{model_forward.1} parent=0 // pred_check
    _
  $region59: #{model_forward.1} parent=0 // pred_check_branch
    %57 = sbr.rel (0) target = $region61
  $region60: #{model_forward.1} parent=0 // pred_region
    _
  $region61: #{model_forward.1} parent=0 // pred_fallthru
    _
  // Predicated region
  $region62: #{model_forward.1} parent=0 // pred_check
    _
  $region63: #{model_forward.1} parent=0 // pred_check_branch
    %59 = sbr.rel (0) target = $region65
  $region64: #{model_forward.1} parent=0 // pred_region
    _
  $region65: #{model_forward.1} parent=0 // pred_fallthru
    _
  // Predicated region
  $region66: #{model_forward.1} parent=0 // pred_check
    _
  $region67: #{model_forward.1} parent=0 // pred_check_branch
    %61 = sbr.rel (0) target = $region69
  $region68: #{model_forward.1} parent=0 // pred_region
    _
  $region69: #{model_forward.1} parent=0 // pred_fallthru
    _
  // Predicated region
  $region70: #{model_forward.1} parent=0 // pred_check
    _
  $region71: #{model_forward.1} parent=0 // pred_check_branch
    %63 = sbr.rel (0) target = $region73
  $region72: #{model_forward.1} parent=0 // pred_region
    _
  $region73: #{model_forward.1} parent=0 // pred_fallthru
    _
  // Predicated region
  $region74: #{model_forward.1} parent=0 // pred_check
    _
  $region75: #{model_forward.1} parent=0 // pred_check_branch
    %65 = sbr.rel (0) target = $region77
  $region76: #{model_forward.1} parent=0 // pred_region
    _
  $region77: #{model_forward.1} parent=0 // pred_fallthru
    _
  // Predicated region
  $region78: #{model_forward.1} parent=0 // pred_check
    _
  $region79: #{model_forward.1} parent=0 // pred_check_branch
    %67 = sbr.rel (0) target = $region81
  $region80: #{model_forward.1} parent=0 // pred_region
    _
  $region81: #{model_forward.1} parent=0 // pred_fallthru
    _
  // Predicated region
  $region82: #{model_forward.1} parent=0 // pred_check
    _
  $region83: #{model_forward.1} parent=0 // pred_check_branch
    %69 = sbr.rel (0) target = $region85
  $region84: #{model_forward.1} parent=0 // pred_region
    _
  $region85: #{model_forward.1} parent=0 // pred_fallthru
    _
  // Predicated region
  $region86: #{model_forward.1} parent=0 // pred_check
    _
  $region87: #{model_forward.1} parent=0 // pred_check_branch
    %71 = sbr.rel (0) target = $region89
  $region88: #{model_forward.1} parent=0 // pred_region
    _
  $region89: #{model_forward.1} parent=0 // pred_fallthru
    _
  // Predicated region
  $region90: #{model_forward.1} parent=0 // pred_check
    _
  $region91: #{model_forward.1} parent=0 // pred_check_branch
    %73 = sbr.rel (0) target = $region93
  $region92: #{model_forward.1} parent=0 // pred_region
    _
  $region93: #{model_forward.1} parent=0 // pred_fallthru
    _
  %v74 = vld [vmem:[%s0] sm:$0xff]
  %v75 = vld [vmem:[%s0 + $0x8] sm:$0xff]
  %v76 = vld [vmem:[%s0 + $0x10] sm:$0xff]
  %v77 = vld [vmem:[%s0 + $0x18] sm:$0xff]
  %v78 = vld [vmem:[%s0 + $0x20] sm:$0xff]
  %v79 = vld [vmem:[%s0 + $0x28] sm:$0xff]
  %v80 = vld [vmem:[%s0 + $0x30] sm:$0xff]
  %v81 = vld [vmem:[%s0 + $0x38] sm:$0xff]
  %v82 = vld [vmem:[%s3] sm:$0xff]
  %v83 = vld [vmem:[%s3 + $0x8] sm:$0xff]
  %v84 = vld [vmem:[%s1] sm:$0xff]
  %v85 = vld [vmem:[%s1 + $0x8] sm:$0xff]
  %v86 = vld [vmem:[%s1 + $0x10] sm:$0xff]
  %v87 = vld [vmem:[%s1 + $0x18] sm:$0xff]
  %v88 = vld [vmem:[%s1 + $0x20] sm:$0xff]
  %v89 = vld [vmem:[%s1 + $0x28] sm:$0xff]
  %v90 = vld [vmem:[%s1 + $0x30] sm:$0xff]
  %v91 = vld [vmem:[%s1 + $0x38] sm:$0xff]
  %v92 = vld [vmem:[%s4] sm:$0xff]
  %v93 = vld [vmem:[%s4 + $0x8] sm:$0xff]
  %vm94 = vcmask 130048
  %v96 = vsel %vm94, %v84, 0
  %v99 = vsel %vm94, %v85, 0
  %v102 = vsel %vm94, %v86, 0
  %v105 = vsel %vm94, %v87, 0
  %v108 = vsel %vm94, %v88, 0
  %v111 = vsel %vm94, %v89, 0
  %v114 = vsel %vm94, %v90, 0
  %v117 = vsel %vm94, %v91, 0
  %119 = vmatprep.subr.mxu0 0.0
  %120 = vmatpush1.msra.mxu0 %v92
  %121 = vmatprep.subr.mxu0 0.0
  %122 = vmatpush1.msra.mxu0 %v93
  %123 = vmatprep.subr.mxu0 0.0
  %124 = vmatpush1.msra.mxu0 0.0
  %125 = vmatprep.subr.mxu0 0.0
  %126 = vmatpush1.msra.mxu0 0.0
  %127 = vmatprep.subr.mxu0 0.0
  %128 = vmatpush1.msra.mxu0 0.0
  %129 = vmatprep.subr.mxu0 0.0
  %130 = vmatpush1.msra.mxu0 0.0
  %131 = vmatprep.subr.mxu0 0.0
  %132 = vmatpush1.msra.mxu0 0.0
  %133 = vmatprep.subr.mxu0 0.0
  %134 = vmatpush1.msra.mxu0 0.0
  %135 = vmatprep.subr.mxu0 0.0
  %136 = vmatpush1.msra.mxu0 0.0
  %137 = vmatprep.subr.mxu0 0.0
  %138 = vmatpush1.msra.mxu0 0.0
  %139 = vmatprep.subr.mxu0 0.0
  %140 = vmatpush1.msra.mxu0 0.0
  %141 = vmatprep.subr.mxu0 0.0
  %142 = vmatpush1.msra.mxu0 0.0
  %143 = vmatprep.subr.mxu0 0.0
  %144 = vmatpush1.msra.mxu0 0.0
  %145 = vmatprep.subr.mxu0 0.0
  %146 = vmatpush1.msra.mxu0 0.0
  %147 = vmatprep.subr.mxu0 0.0
  %148 = vmatpush1.msra.mxu0 0.0
  %149 = vmatprep.subr.mxu0 0.0
  %150 = vmatpush1.msra.mxu0 0.0
  %151 = vmatprep.subr.mxu0 0.0
  %152 = vmatpush1.msra.mxu0 0.0
  %153 = vmatprep.subr.mxu0 0.0
  %154 = vmatpush1.msra.mxu0 0.0
  %155 = vmatprep.subr.mxu0 0.0
  %156 = vmatpush1.msra.mxu0 0.0
  %157 = vmatprep.subr.mxu0 0.0
  %158 = vmatpush1.msra.mxu0 0.0
  %159 = vmatprep.subr.mxu0 0.0
  %160 = vmatpush1.msra.mxu0 0.0
  %161 = vmatprep.subr.mxu0 0.0
  %162 = vmatpush1.msra.mxu0 0.0
  %163 = vmatprep.subr.mxu0 0.0
  %164 = vmatpush1.msra.mxu0 0.0
  %165 = vmatprep.subr.mxu0 0.0
  %166 = vmatpush1.msra.mxu0 0.0
  %167 = vmatprep.subr.mxu0 0.0
  %168 = vmatpush1.msra.mxu0 0.0
  %169 = vmatprep.subr.mxu0 0.0
  %170 = vmatpush1.msra.mxu0 0.0
  %171 = vmatprep.subr.mxu0 0.0
  %172 = vmatpush1.msra.mxu0 0.0
  %173 = vmatprep.subr.mxu0 0.0
  %174 = vmatpush1.msra.mxu0 0.0
  %175 = vmatprep.subr.mxu0 0.0
  %176 = vmatpush1.msra.mxu0 0.0
  %177 = vmatprep.subr.mxu0 0.0
  %178 = vmatpush1.msra.mxu0 0.0
  %179 = vmatprep.subr.mxu0 0.0
  %180 = vmatpush1.msra.mxu0 0.0
  %181 = vmatprep.subr.mxu0 0.0
  %182 = vmatpush1.msra.mxu0 0.0
  %183 = vmatprep.mubr.f32.mxu0 0.0
  %184 = vmatmul.mubr.f32.gmra.mrb[0].mxu0 %v96
  %v185 = vpop.f32.mrb[0].mxu0
  %v186 = vadd.f32 0.0, %v185
  %v187 = vpop.f32.mrb[0].mxu0
  %188 = vmatprep.mubr.f32.mxu0 0.0
  %189 = vmatmul.mubr.f32.gmra.mrb[0].mxu0 %v99
  %v190 = vpop.f32.mrb[0].mxu0
  %v191 = vadd.f32 0.0, %v190
  %v192 = vpop.f32.mrb[0].mxu0
  %193 = vmatprep.mubr.f32.mxu0 0.0
  %194 = vmatmul.mubr.f32.gmra.mrb[0].mxu0 %v102
  %v195 = vpop.f32.mrb[0].mxu0
  %v196 = vadd.f32 0.0, %v195
  %v197 = vpop.f32.mrb[0].mxu0
  %198 = vmatprep.mubr.f32.mxu0 0.0
  %199 = vmatmul.mubr.f32.gmra.mrb[0].mxu0 %v105
  %v200 = vpop.f32.mrb[0].mxu0
  %v201 = vadd.f32 0.0, %v200
  %v202 = vpop.f32.mrb[0].mxu0
  %203 = vmatprep.mubr.f32.mxu0 0.0
  %204 = vmatmul.mubr.f32.gmra.mrb[0].mxu0 %v108
  %v205 = vpop.f32.mrb[0].mxu0
  %v206 = vadd.f32 0.0, %v205
  %v207 = vpop.f32.mrb[0].mxu0
  %208 = vmatprep.mubr.f32.mxu0 0.0
  %209 = vmatmul.mubr.f32.gmra.mrb[0].mxu0 %v111
  %v210 = vpop.f32.mrb[0].mxu0
  %v211 = vadd.f32 0.0, %v210
  %v212 = vpop.f32.mrb[0].mxu0
  %213 = vmatprep.mubr.f32.mxu0 0.0
  %214 = vmatmul.mubr.f32.gmra.mrb[0].mxu0 %v114
  %v215 = vpop.f32.mrb[0].mxu0
  %v216 = vadd.f32 0.0, %v215
  %v217 = vpop.f32.mrb[0].mxu0
  %218 = vmatprep.mubr.f32.mxu0 0.0
  %219 = vmatmul.mubr.f32.gmra.mrb[0].mxu0 %v117
  %v220 = vpop.f32.mrb[0].mxu0
  %v221 = vadd.f32 0.0, %v220
  %v222 = vpop.f32.mrb[0].mxu0
  %223 = vdwg.mxu0
  %v225 = vsel %vm94, %v74, 0
  %v228 = vsel %vm94, %v75, 0
  %v231 = vsel %vm94, %v76, 0
  %v234 = vsel %vm94, %v77, 0
  %v237 = vsel %vm94, %v78, 0
  %v240 = vsel %vm94, %v79, 0
  %v243 = vsel %vm94, %v80, 0
  %v246 = vsel %vm94, %v81, 0
  %248 = vmatprep.subr.mxu0 0.0
  %249 = vmatpush1.msra.mxu0 %v82
  %250 = vmatprep.subr.mxu0 0.0
  %251 = vmatpush1.msra.mxu0 %v83
  %252 = vmatprep.subr.mxu0 0.0
  %253 = vmatpush1.msra.mxu0 0.0
  %254 = vmatprep.subr.mxu0 0.0
  %255 = vmatpush1.msra.mxu0 0.0
  %256 = vmatprep.subr.mxu0 0.0
  %257 = vmatpush1.msra.mxu0 0.0
  %258 = vmatprep.subr.mxu0 0.0
  %259 = vmatpush1.msra.mxu0 0.0
  %260 = vmatprep.subr.mxu0 0.0
  %261 = vmatpush1.msra.mxu0 0.0
  %262 = vmatprep.subr.mxu0 0.0
  %263 = vmatpush1.msra.mxu0 0.0
  %264 = vmatprep.subr.mxu0 0.0
  %265 = vmatpush1.msra.mxu0 0.0
  %266 = vmatprep.subr.mxu0 0.0
  %267 = vmatpush1.msra.mxu0 0.0
  %268 = vmatprep.subr.mxu0 0.0
  %269 = vmatpush1.msra.mxu0 0.0
  %270 = vmatprep.subr.mxu0 0.0
  %271 = vmatpush1.msra.mxu0 0.0
  %272 = vmatprep.subr.mxu0 0.0
  %273 = vmatpush1.msra.mxu0 0.0
  %274 = vmatprep.subr.mxu0 0.0
  %275 = vmatpush1.msra.mxu0 0.0
  %276 = vmatprep.subr.mxu0 0.0
  %277 = vmatpush1.msra.mxu0 0.0
  %278 = vmatprep.subr.mxu0 0.0
  %279 = vmatpush1.msra.mxu0 0.0
  %280 = vmatprep.subr.mxu0 0.0
  %281 = vmatpush1.msra.mxu0 0.0
  %282 = vmatprep.subr.mxu0 0.0
  %283 = vmatpush1.msra.mxu0 0.0
  %284 = vmatprep.subr.mxu0 0.0
  %285 = vmatpush1.msra.mxu0 0.0
  %286 = vmatprep.subr.mxu0 0.0
  %287 = vmatpush1.msra.mxu0 0.0
  %288 = vmatprep.subr.mxu0 0.0
  %289 = vmatpush1.msra.mxu0 0.0
  %290 = vmatprep.subr.mxu0 0.0
  %291 = vmatpush1.msra.mxu0 0.0
  %292 = vmatprep.subr.mxu0 0.0
  %293 = vmatpush1.msra.mxu0 0.0
  %294 = vmatprep.subr.mxu0 0.0
  %295 = vmatpush1.msra.mxu0 0.0
  %296 = vmatprep.subr.mxu0 0.0
  %297 = vmatpush1.msra.mxu0 0.0
  %298 = vmatprep.subr.mxu0 0.0
  %299 = vmatpush1.msra.mxu0 0.0
  %300 = vmatprep.subr.mxu0 0.0
  %301 = vmatpush1.msra.mxu0 0.0
  %302 = vmatprep.subr.mxu0 0.0
  %303 = vmatpush1.msra.mxu0 0.0
  %304 = vmatprep.subr.mxu0 0.0
  %305 = vmatpush1.msra.mxu0 0.0
  %306 = vmatprep.subr.mxu0 0.0
  %307 = vmatpush1.msra.mxu0 0.0
  %308 = vmatprep.subr.mxu0 0.0
  %309 = vmatpush1.msra.mxu0 0.0
  %310 = vmatprep.subr.mxu0 0.0
  %311 = vmatpush1.msra.mxu0 0.0
  %312 = vmatprep.mubr.f32.mxu0 0.0
  %313 = vmatmul.mubr.f32.gmra.mrb[0].mxu0 %v225
  %v314 = vpop.f32.mrb[0].mxu0
  %v315 = vadd.f32 %v186, %v314
  %v316 = vpop.f32.mrb[0].mxu0
  %317 = vmatprep.mubr.f32.mxu0 0.0
  %318 = vmatmul.mubr.f32.gmra.mrb[0].mxu0 %v228
  %v319 = vpop.f32.mrb[0].mxu0
  %v320 = vadd.f32 %v191, %v319
  %v321 = vpop.f32.mrb[0].mxu0
  %322 = vmatprep.mubr.f32.mxu0 0.0
  %323 = vmatmul.mubr.f32.gmra.mrb[0].mxu0 %v231
  %v324 = vpop.f32.mrb[0].mxu0
  %v325 = vadd.f32 %v196, %v324
  %v326 = vpop.f32.mrb[0].mxu0
  %327 = vmatprep.mubr.f32.mxu0 0.0
  %328 = vmatmul.mubr.f32.gmra.mrb[0].mxu0 %v234
  %v329 = vpop.f32.mrb[0].mxu0
  %v330 = vadd.f32 %v201, %v329
  %v331 = vpop.f32.mrb[0].mxu0
  %332 = vmatprep.mubr.f32.mxu0 0.0
  %333 = vmatmul.mubr.f32.gmra.mrb[0].mxu0 %v237
  %v334 = vpop.f32.mrb[0].mxu0
  %v335 = vadd.f32 %v206, %v334
  %v336 = vpop.f32.mrb[0].mxu0
  %337 = vmatprep.mubr.f32.mxu0 0.0
  %338 = vmatmul.mubr.f32.gmra.mrb[0].mxu0 %v240
  %v339 = vpop.f32.mrb[0].mxu0
  %v340 = vadd.f32 %v211, %v339
  %v341 = vpop.f32.mrb[0].mxu0
  %342 = vmatprep.mubr.f32.mxu0 0.0
  %343 = vmatmul.mubr.f32.gmra.mrb[0].mxu0 %v243
  %v344 = vpop.f32.mrb[0].mxu0
  %v345 = vadd.f32 %v216, %v344
  %v346 = vpop.f32.mrb[0].mxu0
  %347 = vmatprep.mubr.f32.mxu0 0.0
  %348 = vmatmul.mubr.f32.gmra.mrb[0].mxu0 %v246
  %v349 = vpop.f32.mrb[0].mxu0
  %v350 = vadd.f32 %v221, %v349
  %v351 = vpop.f32.mrb[0].mxu0
  %352 = vdwg.mxu0
  %v353 = vld [vmem:[%s5] sm:$0x1]
  %v355 = vlaneseq
  %v356 = vshrl.u32 %v355, 7
  %v357 = vsub.s32 0, %v356
  %v358 = vrot.slane %v353, %v357
  %v360 = vadd.f32 %v315, %v358
  %v361 = vadd.f32 %v320, %v358
  %v362 = vadd.f32 %v325, %v358
  %v363 = vadd.f32 %v330, %v358
  %v364 = vadd.f32 %v335, %v358
  %v365 = vadd.f32 %v340, %v358
  %v366 = vadd.f32 %v345, %v358
  %v367 = vadd.f32 %v350, %v358
  %v368 = vld [vmem:[%s2] sm:$0xff]
  %v369 = vld [vmem:[%s2 + $0x8] sm:$0xff]
  %v370 = vld [vmem:[%s2 + $0x10] sm:$0xff]
  %v371 = vld [vmem:[%s2 + $0x18] sm:$0xff]
  %v372 = vld [vmem:[%s2 + $0x20] sm:$0xff]
  %v373 = vld [vmem:[%s2 + $0x28] sm:$0xff]
  %v374 = vld [vmem:[%s2 + $0x30] sm:$0xff]
  %v375 = vld [vmem:[%s2 + $0x38] sm:$0xff]
  %v376 = vld [vmem:[%s6] sm:$0xff]
  %v377 = vld [vmem:[%s6 + $0x8] sm:$0xff]
  %v378 = vld [vmem:[%s6 + $0x10] sm:$0xff]
  %v379 = vld [vmem:[%s6 + $0x18] sm:$0xff]
  %v380 = vld [vmem:[%s7] sm:$0x1]
  %vm381 = vcmask 261120
  %v383 = vsel %vm381, 0.0, 0
  %385 = vmatprep.subr.mxu0 0.0
  %386 = vmatpush1.msra.mxu0 %v376
  %387 = vmatprep.subr.mxu0 0.0
  %388 = vmatpush1.msra.mxu0 %v377
  %389 = vmatprep.subr.mxu0 0.0
  %390 = vmatpush1.msra.mxu0 %v378
  %391 = vmatprep.subr.mxu0 0.0
  %392 = vmatpush1.msra.mxu0 %v379
  %393 = vmatprep.subr.mxu0 0.0
  %394 = vmatpush1.msra.mxu0 0.0
  %395 = vmatprep.subr.mxu0 0.0
  %396 = vmatpush1.msra.mxu0 0.0
  %397 = vmatprep.subr.mxu0 0.0
  %398 = vmatpush1.msra.mxu0 0.0
  %399 = vmatprep.subr.mxu0 0.0
  %400 = vmatpush1.msra.mxu0 0.0
  %401 = vmatprep.subr.mxu0 0.0
  %402 = vmatpush1.msra.mxu0 0.0
  %403 = vmatprep.subr.mxu0 0.0
  %404 = vmatpush1.msra.mxu0 0.0
  %405 = vmatprep.subr.mxu0 0.0
  %406 = vmatpush1.msra.mxu0 0.0
  %407 = vmatprep.subr.mxu0 0.0
  %408 = vmatpush1.msra.mxu0 0.0
  %409 = vmatprep.subr.mxu0 0.0
  %410 = vmatpush1.msra.mxu0 0.0
  %411 = vmatprep.subr.mxu0 0.0
  %412 = vmatpush1.msra.mxu0 0.0
  %413 = vmatprep.subr.mxu0 0.0
  %414 = vmatpush1.msra.mxu0 0.0
  %415 = vmatprep.subr.mxu0 0.0
  %416 = vmatpush1.msra.mxu0 0.0
  %417 = vmatprep.subr.mxu0 0.0
  %418 = vmatpush1.msra.mxu0 0.0
  %419 = vmatprep.subr.mxu0 0.0
  %420 = vmatpush1.msra.mxu0 0.0
  %421 = vmatprep.subr.mxu0 0.0
  %422 = vmatpush1.msra.mxu0 0.0
  %423 = vmatprep.subr.mxu0 0.0
  %424 = vmatpush1.msra.mxu0 0.0
  %425 = vmatprep.subr.mxu0 0.0
  %426 = vmatpush1.msra.mxu0 0.0
  %427 = vmatprep.subr.mxu0 0.0
  %428 = vmatpush1.msra.mxu0 0.0
  %429 = vmatprep.subr.mxu0 0.0
  %430 = vmatpush1.msra.mxu0 0.0
  %431 = vmatprep.subr.mxu0 0.0
  %432 = vmatpush1.msra.mxu0 0.0
  %433 = vmatprep.subr.mxu0 0.0
  %434 = vmatpush1.msra.mxu0 0.0
  %435 = vmatprep.subr.mxu0 0.0
  %436 = vmatpush1.msra.mxu0 0.0
  %437 = vmatprep.subr.mxu0 0.0
  %438 = vmatpush1.msra.mxu0 0.0
  %439 = vmatprep.subr.mxu0 0.0
  %440 = vmatpush1.msra.mxu0 0.0
  %441 = vmatprep.subr.mxu0 0.0
  %442 = vmatpush1.msra.mxu0 0.0
  %443 = vmatprep.subr.mxu0 0.0
  %444 = vmatpush1.msra.mxu0 0.0
  %445 = vmatprep.subr.mxu0 0.0
  %446 = vmatpush1.msra.mxu0 0.0
  %447 = vmatprep.subr.mxu0 0.0
  %448 = vmatpush1.msra.mxu0 0.0
  %449 = vmatprep.mubr.f32.mxu0 0.0
  %450 = vmatmul.mubr.f32.gmra.mrb[0].mxu0 %v383
  %v451 = vpop.f32.mrb[0].mxu0
  %v452 = vadd.f32 0.0, %v451
  %v453 = vpop.f32.mrb[0].mxu0
  %454 = vdwg.mxu0
  %v455 = vadd.f32 %v360, %v452
  %v456 = vxor.u32 %v455, 2147483648
  %v457 = vmul.f32 %v456, 1.442695
  %v458 = vpow.pop %v457
  %v459 = vadd.f32 %v458, 1.0
  %v460 = vrcp.pop %v459
  %v461 = vmul.f32 1.0, %v460
  %v463 = vlaneseq
  %v464 = vshrl.u32 %v463, 7
  %v465 = vsub.s32 0, %v464
  %v466 = vrot.slane %v380, %v465
  %467 = vrot.lane.b32.xlu0 %v466, 64
  %v468 = vpop.permute.xlu0 %467
  %v470 = vadd.f32 %v452, %v468
  %472 = vrot.lane.b32.xlu0 %v470, 64
  %v473 = vpop.permute.xlu0 %472
  %v475 = vmul.f32 %v461, %v473
  %477 = vrot.lane.b32.xlu0 %v475, 64
  %v478 = vpop.permute.xlu0 %477
  %v480 = vadd.f32 %v360, %v478
  %v481 = vtanh.pop %v480
  %v482 = vsub.f32 1.0, %v461
  %484 = vrot.lane.b32.xlu0 %v482, 96
  %v485 = vpop.permute.xlu0 %484
  %v487 = vmul.f32 %v368, %v485
  %489 = vrot.lane.b32.xlu0 %v481, 64
  %v490 = vpop.permute.xlu0 %489
  %v492 = vmul.f32 %v487, %v490
  %v493 = vadd.f32 %v492, 0.0
  %v495 = vsel %vm381, %v493, 0
  %497 = vmatprep.subr.mxu0 0.0
  %498 = vmatpush1.msra.mxu0 %v376
  %499 = vmatprep.subr.mxu0 0.0
  %500 = vmatpush1.msra.mxu0 %v377
  %501 = vmatprep.subr.mxu0 0.0
  %502 = vmatpush1.msra.mxu0 %v378
  %503 = vmatprep.subr.mxu0 0.0
  %504 = vmatpush1.msra.mxu0 %v379
  %505 = vmatprep.subr.mxu0 0.0
  %506 = vmatpush1.msra.mxu0 0.0
  %507 = vmatprep.subr.mxu0 0.0
  %508 = vmatpush1.msra.mxu0 0.0
  %509 = vmatprep.subr.mxu0 0.0
  %510 = vmatpush1.msra.mxu0 0.0
  %511 = vmatprep.subr.mxu0 0.0
  %512 = vmatpush1.msra.mxu0 0.0
  %513 = vmatprep.subr.mxu0 0.0
  %514 = vmatpush1.msra.mxu0 0.0
  %515 = vmatprep.subr.mxu0 0.0
  %516 = vmatpush1.msra.mxu0 0.0
  %517 = vmatprep.subr.mxu0 0.0
  %518 = vmatpush1.msra.mxu0 0.0
  %519 = vmatprep.subr.mxu0 0.0
  %520 = vmatpush1.msra.mxu0 0.0
  %521 = vmatprep.subr.mxu0 0.0
  %522 = vmatpush1.msra.mxu0 0.0
  %523 = vmatprep.subr.mxu0 0.0
  %524 = vmatpush1.msra.mxu0 0.0
  %525 = vmatprep.subr.mxu0 0.0
  %526 = vmatpush1.msra.mxu0 0.0
  %527 = vmatprep.subr.mxu0 0.0
  %528 = vmatpush1.msra.mxu0 0.0
  %529 = vmatprep.subr.mxu0 0.0
  %530 = vmatpush1.msra.mxu0 0.0
  %531 = vmatprep.subr.mxu0 0.0
  %532 = vmatpush1.msra.mxu0 0.0
  %533 = vmatprep.subr.mxu0 0.0
  %534 = vmatpush1.msra.mxu0 0.0
  %535 = vmatprep.subr.mxu0 0.0
  %536 = vmatpush1.msra.mxu0 0.0
  %537 = vmatprep.subr.mxu0 0.0
  %538 = vmatpush1.msra.mxu0 0.0
  %539 = vmatprep.subr.mxu0 0.0
  %540 = vmatpush1.msra.mxu0 0.0
  %541 = vmatprep.subr.mxu0 0.0
  %542 = vmatpush1.msra.mxu0 0.0
  %543 = vmatprep.subr.mxu0 0.0
  %544 = vmatpush1.msra.mxu0 0.0
  %545 = vmatprep.subr.mxu0 0.0
  %546 = vmatpush1.msra.mxu0 0.0
  %547 = vmatprep.subr.mxu0 0.0
  %548 = vmatpush1.msra.mxu0 0.0
  %549 = vmatprep.subr.mxu0 0.0
  %550 = vmatpush1.msra.mxu0 0.0
  %551 = vmatprep.subr.mxu0 0.0
  %552 = vmatpush1.msra.mxu0 0.0
  %553 = vmatprep.subr.mxu0 0.0
  %554 = vmatpush1.msra.mxu0 0.0
  %555 = vmatprep.subr.mxu0 0.0
  %556 = vmatpush1.msra.mxu0 0.0
  %557 = vmatprep.subr.mxu0 0.0
  %558 = vmatpush1.msra.mxu0 0.0
  %559 = vmatprep.subr.mxu0 0.0
  %560 = vmatpush1.msra.mxu0 0.0
  %561 = vmatprep.mubr.f32.mxu0 0.0
  %562 = vmatmul.mubr.f32.gmra.mrb[0].mxu0 %v495
  %v563 = vpop.f32.mrb[0].mxu0
  %v564 = vadd.f32 0.0, %v563
  %v565 = vpop.f32.mrb[0].mxu0
  %566 = vdwg.mxu0
  %v567 = vadd.f32 %v361, %v564
  %v568 = vxor.u32 %v567, 2147483648
  %v569 = vmul.f32 %v568, 1.442695
  %v570 = vpow.pop %v569
  %v571 = vadd.f32 %v570, 1.0
  %v572 = vrcp.pop %v571
  %v573 = vmul.f32 1.0, %v572
  %v574 = vadd.f32 %v564, %v468
  %576 = vrot.lane.b32.xlu0 %v574, 64
  %v577 = vpop.permute.xlu0 %576
  %v579 = vmul.f32 %v573, %v577
  %581 = vrot.lane.b32.xlu0 %v579, 64
  %v582 = vpop.permute.xlu0 %581
  %v584 = vadd.f32 %v361, %v582
  %v585 = vtanh.pop %v584
  %v586 = vsub.f32 1.0, %v573
  %588 = vrot.lane.b32.xlu0 %v586, 96
  %v589 = vpop.permute.xlu0 %588
  %v591 = vmul.f32 %v369, %v589
  %592 = vrot.lane.b32.xlu0 %v493, 64
  %v593 = vpop.permute.xlu0 %592
  %v595 = vsub.f32 %v585, %v593
  %597 = vrot.lane.b32.xlu0 %v595, 64
  %v598 = vpop.permute.xlu0 %597
  %v600 = vmul.f32 %v591, %v598
  %v601 = vadd.f32 %v493, %v600
  %v603 = vsel %vm381, %v601, 0
  %605 = vmatprep.subr.mxu0 0.0
  %606 = vmatpush1.msra.mxu0 %v376
  %607 = vmatprep.subr.mxu0 0.0
  %608 = vmatpush1.msra.mxu0 %v377
  %609 = vmatprep.subr.mxu0 0.0
  %610 = vmatpush1.msra.mxu0 %v378
  %611 = vmatprep.subr.mxu0 0.0
  %612 = vmatpush1.msra.mxu0 %v379
  %613 = vmatprep.subr.mxu0 0.0
  %614 = vmatpush1.msra.mxu0 0.0
  %615 = vmatprep.subr.mxu0 0.0
  %616 = vmatpush1.msra.mxu0 0.0
  %617 = vmatprep.subr.mxu0 0.0
  %618 = vmatpush1.msra.mxu0 0.0
  %619 = vmatprep.subr.mxu0 0.0
  %620 = vmatpush1.msra.mxu0 0.0
  %621 = vmatprep.subr.mxu0 0.0
  %622 = vmatpush1.msra.mxu0 0.0
  %623 = vmatprep.subr.mxu0 0.0
  %624 = vmatpush1.msra.mxu0 0.0
  %625 = vmatprep.subr.mxu0 0.0
  %626 = vmatpush1.msra.mxu0 0.0
  %627 = vmatprep.subr.mxu0 0.0
  %628 = vmatpush1.msra.mxu0 0.0
  %629 = vmatprep.subr.mxu0 0.0
  %630 = vmatpush1.msra.mxu0 0.0
  %631 = vmatprep.subr.mxu0 0.0
  %632 = vmatpush1.msra.mxu0 0.0
  %633 = vmatprep.subr.mxu0 0.0
  %634 = vmatpush1.msra.mxu0 0.0
  %635 = vmatprep.subr.mxu0 0.0
  %636 = vmatpush1.msra.mxu0 0.0
  %637 = vmatprep.subr.mxu0 0.0
  %638 = vmatpush1.msra.mxu0 0.0
  %639 = vmatprep.subr.mxu0 0.0
  %640 = vmatpush1.msra.mxu0 0.0
  %641 = vmatprep.subr.mxu0 0.0
  %642 = vmatpush1.msra.mxu0 0.0
  %643 = vmatprep.subr.mxu0 0.0
  %644 = vmatpush1.msra.mxu0 0.0
  %645 = vmatprep.subr.mxu0 0.0
  %646 = vmatpush1.msra.mxu0 0.0
  %647 = vmatprep.subr.mxu0 0.0
  %648 = vmatpush1.msra.mxu0 0.0
  %649 = vmatprep.subr.mxu0 0.0
  %650 = vmatpush1.msra.mxu0 0.0
  %651 = vmatprep.subr.mxu0 0.0
  %652 = vmatpush1.msra.mxu0 0.0
  %653 = vmatprep.subr.mxu0 0.0
  %654 = vmatpush1.msra.mxu0 0.0
  %655 = vmatprep.subr.mxu0 0.0
  %656 = vmatpush1.msra.mxu0 0.0
  %657 = vmatprep.subr.mxu0 0.0
  %658 = vmatpush1.msra.mxu0 0.0
  %659 = vmatprep.subr.mxu0 0.0
  %660 = vmatpush1.msra.mxu0 0.0
  %661 = vmatprep.subr.mxu0 0.0
  %662 = vmatpush1.msra.mxu0 0.0
  %663 = vmatprep.subr.mxu0 0.0
  %664 = vmatpush1.msra.mxu0 0.0
  %665 = vmatprep.subr.mxu0 0.0
  %666 = vmatpush1.msra.mxu0 0.0
  %667 = vmatprep.subr.mxu0 0.0
  %668 = vmatpush1.msra.mxu0 0.0
  %669 = vmatprep.mubr.f32.mxu0 0.0
  %670 = vmatmul.mubr.f32.gmra.mrb[0].mxu0 %v603
  %v671 = vpop.f32.mrb[0].mxu0
  %v672 = vadd.f32 0.0, %v671
  %v673 = vpop.f32.mrb[0].mxu0
  %674 = vdwg.mxu0
  %v675 = vadd.f32 %v362, %v672
  %v676 = vxor.u32 %v675, 2147483648
  %v677 = vmul.f32 %v676, 1.442695
  %v678 = vpow.pop %v677
  %v679 = vadd.f32 %v678, 1.0
  %v680 = vrcp.pop %v679
  %v681 = vmul.f32 1.0, %v680
  %v682 = vadd.f32 %v672, %v468
  %684 = vrot.lane.b32.xlu0 %v682, 64
  %v685 = vpop.permute.xlu0 %684
  %v687 = vmul.f32 %v681, %v685
  %689 = vrot.lane.b32.xlu0 %v687, 64
  %v690 = vpop.permute.xlu0 %689
  %v692 = vadd.f32 %v362, %v690
  %v693 = vtanh.pop %v692
  %v694 = vsub.f32 1.0, %v681
  %696 = vrot.lane.b32.xlu0 %v694, 96
  %v697 = vpop.permute.xlu0 %696
  %v699 = vmul.f32 %v370, %v697
  %700 = vrot.lane.b32.xlu0 %v601, 64
  %v701 = vpop.permute.xlu0 %700
  %v703 = vsub.f32 %v693, %v701
  %705 = vrot.lane.b32.xlu0 %v703, 64
  %v706 = vpop.permute.xlu0 %705
  %v708 = vmul.f32 %v699, %v706
  %v709 = vadd.f32 %v601, %v708
  %v711 = vsel %vm381, %v709, 0
  %713 = vmatprep.subr.mxu0 0.0
  %714 = vmatpush1.msra.mxu0 %v376
  %715 = vmatprep.subr.mxu0 0.0
  %716 = vmatpush1.msra.mxu0 %v377
  %717 = vmatprep.subr.mxu0 0.0
  %718 = vmatpush1.msra.mxu0 %v378
  %719 = vmatprep.subr.mxu0 0.0
  %720 = vmatpush1.msra.mxu0 %v379
  %721 = vmatprep.subr.mxu0 0.0
  %722 = vmatpush1.msra.mxu0 0.0
  %723 = vmatprep.subr.mxu0 0.0
  %724 = vmatpush1.msra.mxu0 0.0
  %725 = vmatprep.subr.mxu0 0.0
  %726 = vmatpush1.msra.mxu0 0.0
  %727 = vmatprep.subr.mxu0 0.0
  %728 = vmatpush1.msra.mxu0 0.0
  %729 = vmatprep.subr.mxu0 0.0
  %730 = vmatpush1.msra.mxu0 0.0
  %731 = vmatprep.subr.mxu0 0.0
  %732 = vmatpush1.msra.mxu0 0.0
  %733 = vmatprep.subr.mxu0 0.0
  %734 = vmatpush1.msra.mxu0 0.0
  %735 = vmatprep.subr.mxu0 0.0
  %736 = vmatpush1.msra.mxu0 0.0
  %737 = vmatprep.subr.mxu0 0.0
  %738 = vmatpush1.msra.mxu0 0.0
  %739 = vmatprep.subr.mxu0 0.0
  %740 = vmatpush1.msra.mxu0 0.0
  %741 = vmatprep.subr.mxu0 0.0
  %742 = vmatpush1.msra.mxu0 0.0
  %743 = vmatprep.subr.mxu0 0.0
  %744 = vmatpush1.msra.mxu0 0.0
  %745 = vmatprep.subr.mxu0 0.0
  %746 = vmatpush1.msra.mxu0 0.0
  %747 = vmatprep.subr.mxu0 0.0
  %748 = vmatpush1.msra.mxu0 0.0
  %749 = vmatprep.subr.mxu0 0.0
  %750 = vmatpush1.msra.mxu0 0.0
  %751 = vmatprep.subr.mxu0 0.0
  %752 = vmatpush1.msra.mxu0 0.0
  %753 = vmatprep.subr.mxu0 0.0
  %754 = vmatpush1.msra.mxu0 0.0
  %755 = vmatprep.subr.mxu0 0.0
  %756 = vmatpush1.msra.mxu0 0.0
  %757 = vmatprep.subr.mxu0 0.0
  %758 = vmatpush1.msra.mxu0 0.0
  %759 = vmatprep.subr.mxu0 0.0
  %760 = vmatpush1.msra.mxu0 0.0
  %761 = vmatprep.subr.mxu0 0.0
  %762 = vmatpush1.msra.mxu0 0.0
  %763 = vmatprep.subr.mxu0 0.0
  %764 = vmatpush1.msra.mxu0 0.0
  %765 = vmatprep.subr.mxu0 0.0
  %766 = vmatpush1.msra.mxu0 0.0
  %767 = vmatprep.subr.mxu0 0.0
  %768 = vmatpush1.msra.mxu0 0.0
  %769 = vmatprep.subr.mxu0 0.0
  %770 = vmatpush1.msra.mxu0 0.0
  %771 = vmatprep.subr.mxu0 0.0
  %772 = vmatpush1.msra.mxu0 0.0
  %773 = vmatprep.subr.mxu0 0.0
  %774 = vmatpush1.msra.mxu0 0.0
  %775 = vmatprep.subr.mxu0 0.0
  %776 = vmatpush1.msra.mxu0 0.0
  %777 = vmatprep.mubr.f32.mxu0 0.0
  %778 = vmatmul.mubr.f32.gmra.mrb[0].mxu0 %v711
  %v779 = vpop.f32.mrb[0].mxu0
  %v780 = vadd.f32 0.0, %v779
  %v781 = vpop.f32.mrb[0].mxu0
  %782 = vdwg.mxu0
  %v783 = vadd.f32 %v363, %v780
  %v784 = vxor.u32 %v783, 2147483648
  %v785 = vmul.f32 %v784, 1.442695
  %v786 = vpow.pop %v785
  %v787 = vadd.f32 %v786, 1.0
  %v788 = vrcp.pop %v787
  %v789 = vmul.f32 1.0, %v788
  %v790 = vadd.f32 %v780, %v468
  %792 = vrot.lane.b32.xlu0 %v790, 64
  %v793 = vpop.permute.xlu0 %792
  %v795 = vmul.f32 %v789, %v793
  %797 = vrot.lane.b32.xlu0 %v795, 64
  %v798 = vpop.permute.xlu0 %797
  %v800 = vadd.f32 %v363, %v798
  %v801 = vtanh.pop %v800
  %v802 = vsub.f32 1.0, %v789
  %804 = vrot.lane.b32.xlu0 %v802, 96
  %v805 = vpop.permute.xlu0 %804
  %v807 = vmul.f32 %v371, %v805
  %808 = vrot.lane.b32.xlu0 %v709, 64
  %v809 = vpop.permute.xlu0 %808
  %v811 = vsub.f32 %v801, %v809
  %813 = vrot.lane.b32.xlu0 %v811, 64
  %v814 = vpop.permute.xlu0 %813
  %v816 = vmul.f32 %v807, %v814
  %v817 = vadd.f32 %v709, %v816
  %v819 = vsel %vm381, %v817, 0
  %821 = vmatprep.subr.mxu0 0.0
  %822 = vmatpush1.msra.mxu0 %v376
  %823 = vmatprep.subr.mxu0 0.0
  %824 = vmatpush1.msra.mxu0 %v377
  %825 = vmatprep.subr.mxu0 0.0
  %826 = vmatpush1.msra.mxu0 %v378
  %827 = vmatprep.subr.mxu0 0.0
  %828 = vmatpush1.msra.mxu0 %v379
  %829 = vmatprep.subr.mxu0 0.0
  %830 = vmatpush1.msra.mxu0 0.0
  %831 = vmatprep.subr.mxu0 0.0
  %832 = vmatpush1.msra.mxu0 0.0
  %833 = vmatprep.subr.mxu0 0.0
  %834 = vmatpush1.msra.mxu0 0.0
  %835 = vmatprep.subr.mxu0 0.0
  %836 = vmatpush1.msra.mxu0 0.0
  %837 = vmatprep.subr.mxu0 0.0
  %838 = vmatpush1.msra.mxu0 0.0
  %839 = vmatprep.subr.mxu0 0.0
  %840 = vmatpush1.msra.mxu0 0.0
  %841 = vmatprep.subr.mxu0 0.0
  %842 = vmatpush1.msra.mxu0 0.0
  %843 = vmatprep.subr.mxu0 0.0
  %844 = vmatpush1.msra.mxu0 0.0
  %845 = vmatprep.subr.mxu0 0.0
  %846 = vmatpush1.msra.mxu0 0.0
  %847 = vmatprep.subr.mxu0 0.0
  %848 = vmatpush1.msra.mxu0 0.0
  %849 = vmatprep.subr.mxu0 0.0
  %850 = vmatpush1.msra.mxu0 0.0
  %851 = vmatprep.subr.mxu0 0.0
  %852 = vmatpush1.msra.mxu0 0.0
  %853 = vmatprep.subr.mxu0 0.0
  %854 = vmatpush1.msra.mxu0 0.0
  %855 = vmatprep.subr.mxu0 0.0
  %856 = vmatpush1.msra.mxu0 0.0
  %857 = vmatprep.subr.mxu0 0.0
  %858 = vmatpush1.msra.mxu0 0.0
  %859 = vmatprep.subr.mxu0 0.0
  %860 = vmatpush1.msra.mxu0 0.0
  %861 = vmatprep.subr.mxu0 0.0
  %862 = vmatpush1.msra.mxu0 0.0
  %863 = vmatprep.subr.mxu0 0.0
  %864 = vmatpush1.msra.mxu0 0.0
  %865 = vmatprep.subr.mxu0 0.0
  %866 = vmatpush1.msra.mxu0 0.0
  %867 = vmatprep.subr.mxu0 0.0
  %868 = vmatpush1.msra.mxu0 0.0
  %869 = vmatprep.subr.mxu0 0.0
  %870 = vmatpush1.msra.mxu0 0.0
  %871 = vmatprep.subr.mxu0 0.0
  %872 = vmatpush1.msra.mxu0 0.0
  %873 = vmatprep.subr.mxu0 0.0
  %874 = vmatpush1.msra.mxu0 0.0
  %875 = vmatprep.subr.mxu0 0.0
  %876 = vmatpush1.msra.mxu0 0.0
  %877 = vmatprep.subr.mxu0 0.0
  %878 = vmatpush1.msra.mxu0 0.0
  %879 = vmatprep.subr.mxu0 0.0
  %880 = vmatpush1.msra.mxu0 0.0
  %881 = vmatprep.subr.mxu0 0.0
  %882 = vmatpush1.msra.mxu0 0.0
  %883 = vmatprep.subr.mxu0 0.0
  %884 = vmatpush1.msra.mxu0 0.0
  %885 = vmatprep.mubr.f32.mxu0 0.0
  %886 = vmatmul.mubr.f32.gmra.mrb[0].mxu0 %v819
  %v887 = vpop.f32.mrb[0].mxu0
  %v888 = vadd.f32 0.0, %v887
  %v889 = vpop.f32.mrb[0].mxu0
  %890 = vdwg.mxu0
  %v891 = vadd.f32 %v364, %v888
  %v892 = vxor.u32 %v891, 2147483648
  %v893 = vmul.f32 %v892, 1.442695
  %v894 = vpow.pop %v893
  %v895 = vadd.f32 %v894, 1.0
  %v896 = vrcp.pop %v895
  %v897 = vmul.f32 1.0, %v896
  %v898 = vadd.f32 %v888, %v468
  %900 = vrot.lane.b32.xlu0 %v898, 64
  %v901 = vpop.permute.xlu0 %900
  %v903 = vmul.f32 %v897, %v901
  %905 = vrot.lane.b32.xlu0 %v903, 64
  %v906 = vpop.permute.xlu0 %905
  %v908 = vadd.f32 %v364, %v906
  %v909 = vtanh.pop %v908
  %v910 = vsub.f32 1.0, %v897
  %912 = vrot.lane.b32.xlu0 %v910, 96
  %v913 = vpop.permute.xlu0 %912
  %v915 = vmul.f32 %v372, %v913
  %916 = vrot.lane.b32.xlu0 %v817, 64
  %v917 = vpop.permute.xlu0 %916
  %v919 = vsub.f32 %v909, %v917
  %921 = vrot.lane.b32.xlu0 %v919, 64
  %v922 = vpop.permute.xlu0 %921
  %v924 = vmul.f32 %v915, %v922
  %v925 = vadd.f32 %v817, %v924
  %v927 = vsel %vm381, %v925, 0
  %929 = vmatprep.subr.mxu0 0.0
  %930 = vmatpush1.msra.mxu0 %v376
  %931 = vmatprep.subr.mxu0 0.0
  %932 = vmatpush1.msra.mxu0 %v377
  %933 = vmatprep.subr.mxu0 0.0
  %934 = vmatpush1.msra.mxu0 %v378
  %935 = vmatprep.subr.mxu0 0.0
  %936 = vmatpush1.msra.mxu0 %v379
  %937 = vmatprep.subr.mxu0 0.0
  %938 = vmatpush1.msra.mxu0 0.0
  %939 = vmatprep.subr.mxu0 0.0
  %940 = vmatpush1.msra.mxu0 0.0
  %941 = vmatprep.subr.mxu0 0.0
  %942 = vmatpush1.msra.mxu0 0.0
  %943 = vmatprep.subr.mxu0 0.0
  %944 = vmatpush1.msra.mxu0 0.0
  %945 = vmatprep.subr.mxu0 0.0
  %946 = vmatpush1.msra.mxu0 0.0
  %947 = vmatprep.subr.mxu0 0.0
  %948 = vmatpush1.msra.mxu0 0.0
  %949 = vmatprep.subr.mxu0 0.0
  %950 = vmatpush1.msra.mxu0 0.0
  %951 = vmatprep.subr.mxu0 0.0
  %952 = vmatpush1.msra.mxu0 0.0
  %953 = vmatprep.subr.mxu0 0.0
  %954 = vmatpush1.msra.mxu0 0.0
  %955 = vmatprep.subr.mxu0 0.0
  %956 = vmatpush1.msra.mxu0 0.0
  %957 = vmatprep.subr.mxu0 0.0
  %958 = vmatpush1.msra.mxu0 0.0
  %959 = vmatprep.subr.mxu0 0.0
  %960 = vmatpush1.msra.mxu0 0.0
  %961 = vmatprep.subr.mxu0 0.0
  %962 = vmatpush1.msra.mxu0 0.0
  %963 = vmatprep.subr.mxu0 0.0
  %964 = vmatpush1.msra.mxu0 0.0
  %965 = vmatprep.subr.mxu0 0.0
  %966 = vmatpush1.msra.mxu0 0.0
  %967 = vmatprep.subr.mxu0 0.0
  %968 = vmatpush1.msra.mxu0 0.0
  %969 = vmatprep.subr.mxu0 0.0
  %970 = vmatpush1.msra.mxu0 0.0
  %971 = vmatprep.subr.mxu0 0.0
  %972 = vmatpush1.msra.mxu0 0.0
  %973 = vmatprep.subr.mxu0 0.0
  %974 = vmatpush1.msra.mxu0 0.0
  %975 = vmatprep.subr.mxu0 0.0
  %976 = vmatpush1.msra.mxu0 0.0
  %977 = vmatprep.subr.mxu0 0.0
  %978 = vmatpush1.msra.mxu0 0.0
  %979 = vmatprep.subr.mxu0 0.0
  %980 = vmatpush1.msra.mxu0 0.0
  %981 = vmatprep.subr.mxu0 0.0
  %982 = vmatpush1.msra.mxu0 0.0
  %983 = vmatprep.subr.mxu0 0.0
  %984 = vmatpush1.msra.mxu0 0.0
  %985 = vmatprep.subr.mxu0 0.0
  %986 = vmatpush1.msra.mxu0 0.0
  %987 = vmatprep.subr.mxu0 0.0
  %988 = vmatpush1.msra.mxu0 0.0
  %989 = vmatprep.subr.mxu0 0.0
  %990 = vmatpush1.msra.mxu0 0.0
  %991 = vmatprep.subr.mxu0 0.0
  %992 = vmatpush1.msra.mxu0 0.0
  %993 = vmatprep.mubr.f32.mxu0 0.0
  %994 = vmatmul.mubr.f32.gmra.mrb[0].mxu0 %v927
  %v995 = vpop.f32.mrb[0].mxu0
  %v996 = vadd.f32 0.0, %v995
  %v997 = vpop.f32.mrb[0].mxu0
  %998 = vdwg.mxu0
  %v999 = vadd.f32 %v365, %v996
  %v1000 = vxor.u32 %v999, 2147483648
  %v1001 = vmul.f32 %v1000, 1.442695
  %v1002 = vpow.pop %v1001
  %v1003 = vadd.f32 %v1002, 1.0
  %v1004 = vrcp.pop %v1003
  %v1005 = vmul.f32 1.0, %v1004
  %v1006 = vadd.f32 %v996, %v468
  %1008 = vrot.lane.b32.xlu0 %v1006, 64
  %v1009 = vpop.permute.xlu0 %1008
  %v1011 = vmul.f32 %v1005, %v1009
  %1013 = vrot.lane.b32.xlu0 %v1011, 64
  %v1014 = vpop.permute.xlu0 %1013
  %v1016 = vadd.f32 %v365, %v1014
  %v1017 = vtanh.pop %v1016
  %v1018 = vsub.f32 1.0, %v1005
  %1020 = vrot.lane.b32.xlu0 %v1018, 96
  %v1021 = vpop.permute.xlu0 %1020
  %v1023 = vmul.f32 %v373, %v1021
  %1024 = vrot.lane.b32.xlu0 %v925, 64
  %v1025 = vpop.permute.xlu0 %1024
  %v1027 = vsub.f32 %v1017, %v1025
  %1029 = vrot.lane.b32.xlu0 %v1027, 64
  %v1030 = vpop.permute.xlu0 %1029
  %v1032 = vmul.f32 %v1023, %v1030
  %v1033 = vadd.f32 %v925, %v1032
  %v1035 = vsel %vm381, %v1033, 0
  %1037 = vmatprep.subr.mxu0 0.0
  %1038 = vmatpush1.msra.mxu0 %v376
  %1039 = vmatprep.subr.mxu0 0.0
  %1040 = vmatpush1.msra.mxu0 %v377
  %1041 = vmatprep.subr.mxu0 0.0
  %1042 = vmatpush1.msra.mxu0 %v378
  %1043 = vmatprep.subr.mxu0 0.0
  %1044 = vmatpush1.msra.mxu0 %v379
  %1045 = vmatprep.subr.mxu0 0.0
  %1046 = vmatpush1.msra.mxu0 0.0
  %1047 = vmatprep.subr.mxu0 0.0
  %1048 = vmatpush1.msra.mxu0 0.0
  %1049 = vmatprep.subr.mxu0 0.0
  %1050 = vmatpush1.msra.mxu0 0.0
  %1051 = vmatprep.subr.mxu0 0.0
  %1052 = vmatpush1.msra.mxu0 0.0
  %1053 = vmatprep.subr.mxu0 0.0
  %1054 = vmatpush1.msra.mxu0 0.0
  %1055 = vmatprep.subr.mxu0 0.0
  %1056 = vmatpush1.msra.mxu0 0.0
  %1057 = vmatprep.subr.mxu0 0.0
  %1058 = vmatpush1.msra.mxu0 0.0
  %1059 = vmatprep.subr.mxu0 0.0
  %1060 = vmatpush1.msra.mxu0 0.0
  %1061 = vmatprep.subr.mxu0 0.0
  %1062 = vmatpush1.msra.mxu0 0.0
  %1063 = vmatprep.subr.mxu0 0.0
  %1064 = vmatpush1.msra.mxu0 0.0
  %1065 = vmatprep.subr.mxu0 0.0
  %1066 = vmatpush1.msra.mxu0 0.0
  %1067 = vmatprep.subr.mxu0 0.0
  %1068 = vmatpush1.msra.mxu0 0.0
  %1069 = vmatprep.subr.mxu0 0.0
  %1070 = vmatpush1.msra.mxu0 0.0
  %1071 = vmatprep.subr.mxu0 0.0
  %1072 = vmatpush1.msra.mxu0 0.0
  %1073 = vmatprep.subr.mxu0 0.0
  %1074 = vmatpush1.msra.mxu0 0.0
  %1075 = vmatprep.subr.mxu0 0.0
  %1076 = vmatpush1.msra.mxu0 0.0
  %1077 = vmatprep.subr.mxu0 0.0
  %1078 = vmatpush1.msra.mxu0 0.0
  %1079 = vmatprep.subr.mxu0 0.0
  %1080 = vmatpush1.msra.mxu0 0.0
  %1081 = vmatprep.subr.mxu0 0.0
  %1082 = vmatpush1.msra.mxu0 0.0
  %1083 = vmatprep.subr.mxu0 0.0
  %1084 = vmatpush1.msra.mxu0 0.0
  %1085 = vmatprep.subr.mxu0 0.0
  %1086 = vmatpush1.msra.mxu0 0.0
  %1087 = vmatprep.subr.mxu0 0.0
  %1088 = vmatpush1.msra.mxu0 0.0
  %1089 = vmatprep.subr.mxu0 0.0
  %1090 = vmatpush1.msra.mxu0 0.0
  %1091 = vmatprep.subr.mxu0 0.0
  %1092 = vmatpush1.msra.mxu0 0.0
  %1093 = vmatprep.subr.mxu0 0.0
  %1094 = vmatpush1.msra.mxu0 0.0
  %1095 = vmatprep.subr.mxu0 0.0
  %1096 = vmatpush1.msra.mxu0 0.0
  %1097 = vmatprep.subr.mxu0 0.0
  %1098 = vmatpush1.msra.mxu0 0.0
  %1099 = vmatprep.subr.mxu0 0.0
  %1100 = vmatpush1.msra.mxu0 0.0
  %1101 = vmatprep.mubr.f32.mxu0 0.0
  %1102 = vmatmul.mubr.f32.gmra.mrb[0].mxu0 %v1035
  %v1103 = vpop.f32.mrb[0].mxu0
  %v1104 = vadd.f32 0.0, %v1103
  %v1105 = vpop.f32.mrb[0].mxu0
  %1106 = vdwg.mxu0
  %v1107 = vadd.f32 %v366, %v1104
  %v1108 = vxor.u32 %v1107, 2147483648
  %v1109 = vmul.f32 %v1108, 1.442695
  %v1110 = vpow.pop %v1109
  %v1111 = vadd.f32 %v1110, 1.0
  %v1112 = vrcp.pop %v1111
  %v1113 = vmul.f32 1.0, %v1112
  %v1114 = vadd.f32 %v1104, %v468
  %1116 = vrot.lane.b32.xlu0 %v1114, 64
  %v1117 = vpop.permute.xlu0 %1116
  %v1119 = vmul.f32 %v1113, %v1117
  %1121 = vrot.lane.b32.xlu0 %v1119, 64
  %v1122 = vpop.permute.xlu0 %1121
  %v1124 = vadd.f32 %v366, %v1122
  %v1125 = vtanh.pop %v1124
  %v1126 = vsub.f32 1.0, %v1113
  %1128 = vrot.lane.b32.xlu0 %v1126, 96
  %v1129 = vpop.permute.xlu0 %1128
  %v1131 = vmul.f32 %v374, %v1129
  %1132 = vrot.lane.b32.xlu0 %v1033, 64
  %v1133 = vpop.permute.xlu0 %1132
  %v1135 = vsub.f32 %v1125, %v1133
  %1137 = vrot.lane.b32.xlu0 %v1135, 64
  %v1138 = vpop.permute.xlu0 %1137
  %v1140 = vmul.f32 %v1131, %v1138
  %v1141 = vadd.f32 %v1033, %v1140
  %v1143 = vsel %vm381, %v1141, 0
  %1145 = vmatprep.subr.mxu0 0.0
  %1146 = vmatpush1.msra.mxu0 %v376
  %1147 = vmatprep.subr.mxu0 0.0
  %1148 = vmatpush1.msra.mxu0 %v377
  %1149 = vmatprep.subr.mxu0 0.0
  %1150 = vmatpush1.msra.mxu0 %v378
  %1151 = vmatprep.subr.mxu0 0.0
  %1152 = vmatpush1.msra.mxu0 %v379
  %1153 = vmatprep.subr.mxu0 0.0
  %1154 = vmatpush1.msra.mxu0 0.0
  %1155 = vmatprep.subr.mxu0 0.0
  %1156 = vmatpush1.msra.mxu0 0.0
  %1157 = vmatprep.subr.mxu0 0.0
  %1158 = vmatpush1.msra.mxu0 0.0
  %1159 = vmatprep.subr.mxu0 0.0
  %1160 = vmatpush1.msra.mxu0 0.0
  %1161 = vmatprep.subr.mxu0 0.0
  %1162 = vmatpush1.msra.mxu0 0.0
  %1163 = vmatprep.subr.mxu0 0.0
  %1164 = vmatpush1.msra.mxu0 0.0
  %1165 = vmatprep.subr.mxu0 0.0
  %1166 = vmatpush1.msra.mxu0 0.0
  %1167 = vmatprep.subr.mxu0 0.0
  %1168 = vmatpush1.msra.mxu0 0.0
  %1169 = vmatprep.subr.mxu0 0.0
  %1170 = vmatpush1.msra.mxu0 0.0
  %1171 = vmatprep.subr.mxu0 0.0
  %1172 = vmatpush1.msra.mxu0 0.0
  %1173 = vmatprep.subr.mxu0 0.0
  %1174 = vmatpush1.msra.mxu0 0.0
  %1175 = vmatprep.subr.mxu0 0.0
  %1176 = vmatpush1.msra.mxu0 0.0
  %1177 = vmatprep.subr.mxu0 0.0
  %1178 = vmatpush1.msra.mxu0 0.0
  %1179 = vmatprep.subr.mxu0 0.0
  %1180 = vmatpush1.msra.mxu0 0.0
  %1181 = vmatprep.subr.mxu0 0.0
  %1182 = vmatpush1.msra.mxu0 0.0
  %1183 = vmatprep.subr.mxu0 0.0
  %1184 = vmatpush1.msra.mxu0 0.0
  %1185 = vmatprep.subr.mxu0 0.0
  %1186 = vmatpush1.msra.mxu0 0.0
  %1187 = vmatprep.subr.mxu0 0.0
  %1188 = vmatpush1.msra.mxu0 0.0
  %1189 = vmatprep.subr.mxu0 0.0
  %1190 = vmatpush1.msra.mxu0 0.0
  %1191 = vmatprep.subr.mxu0 0.0
  %1192 = vmatpush1.msra.mxu0 0.0
  %1193 = vmatprep.subr.mxu0 0.0
  %1194 = vmatpush1.msra.mxu0 0.0
  %1195 = vmatprep.subr.mxu0 0.0
  %1196 = vmatpush1.msra.mxu0 0.0
  %1197 = vmatprep.subr.mxu0 0.0
  %1198 = vmatpush1.msra.mxu0 0.0
  %1199 = vmatprep.subr.mxu0 0.0
  %1200 = vmatpush1.msra.mxu0 0.0
  %1201 = vmatprep.subr.mxu0 0.0
  %1202 = vmatpush1.msra.mxu0 0.0
  %1203 = vmatprep.subr.mxu0 0.0
  %1204 = vmatpush1.msra.mxu0 0.0
  %1205 = vmatprep.subr.mxu0 0.0
  %1206 = vmatpush1.msra.mxu0 0.0
  %1207 = vmatprep.subr.mxu0 0.0
  %1208 = vmatpush1.msra.mxu0 0.0
  %1209 = vmatprep.mubr.f32.mxu0 0.0
  %1210 = vmatmul.mubr.f32.gmra.mrb[0].mxu0 %v1143
  %v1211 = vpop.f32.mrb[0].mxu0
  %v1212 = vadd.f32 0.0, %v1211
  %v1213 = vpop.f32.mrb[0].mxu0
  %1214 = vdwg.mxu0
  %v1215 = vadd.f32 %v367, %v1212
  %v1216 = vxor.u32 %v1215, 2147483648
  %v1217 = vmul.f32 %v1216, 1.442695
  %v1218 = vpow.pop %v1217
  %v1219 = vadd.f32 %v1218, 1.0
  %v1220 = vrcp.pop %v1219
  %v1221 = vmul.f32 1.0, %v1220
  %v1222 = vadd.f32 %v1212, %v468
  %1224 = vrot.lane.b32.xlu0 %v1222, 64
  %v1225 = vpop.permute.xlu0 %1224
  %v1227 = vmul.f32 %v1221, %v1225
  %1229 = vrot.lane.b32.xlu0 %v1227, 64
  %v1230 = vpop.permute.xlu0 %1229
  %v1232 = vadd.f32 %v367, %v1230
  %v1233 = vtanh.pop %v1232
  %v1234 = vsub.f32 1.0, %v1221
  %1236 = vrot.lane.b32.xlu0 %v1234, 96
  %v1237 = vpop.permute.xlu0 %1236
  %v1239 = vmul.f32 %v375, %v1237
  %1240 = vrot.lane.b32.xlu0 %v1141, 64
  %v1241 = vpop.permute.xlu0 %1240
  %v1243 = vsub.f32 %v1233, %v1241
  %1245 = vrot.lane.b32.xlu0 %v1243, 64
  %v1246 = vpop.permute.xlu0 %1245
  %v1248 = vmul.f32 %v1239, %v1246
  %v1249 = vadd.f32 %v1141, %v1248
  %v1250 = vld [vmem:[%s8] sm:$0xff]
  %v1251 = vld [vmem:[%s8 + $0x8] sm:$0xff]
  %v1252 = vld [vmem:[%s8 + $0x10] sm:$0xff]
  %vm1253 = vcmask 64512
  %v1255 = vsel %vm1253, %v1250, 0
  %v1258 = vsel %vm1253, %v1251, 0
  %v1261 = vsel %vm1253, %v1252, 0
  %1263 = vmatprep.subr.mxu0 0.0
  %1264 = vmatpush1.msra.mxu0 %v1249
  %1265 = vmatprep.subr.mxu0 0.0
  %1266 = vmatpush1.msra.mxu0 0.0
  %1267 = vmatprep.subr.mxu0 0.0
  %1268 = vmatpush1.msra.mxu0 0.0
  %1269 = vmatprep.subr.mxu0 0.0
  %1270 = vmatpush1.msra.mxu0 0.0
  %1271 = vmatprep.subr.mxu0 0.0
  %1272 = vmatpush1.msra.mxu0 0.0
  %1273 = vmatprep.subr.mxu0 0.0
  %1274 = vmatpush1.msra.mxu0 0.0
  %1275 = vmatprep.subr.mxu0 0.0
  %1276 = vmatpush1.msra.mxu0 0.0
  %1277 = vmatprep.subr.mxu0 0.0
  %1278 = vmatpush1.msra.mxu0 0.0
  %1279 = vmatprep.subr.mxu0 0.0
  %1280 = vmatpush1.msra.mxu0 0.0
  %1281 = vmatprep.subr.mxu0 0.0
  %1282 = vmatpush1.msra.mxu0 0.0
  %1283 = vmatprep.subr.mxu0 0.0
  %1284 = vmatpush1.msra.mxu0 0.0
  %1285 = vmatprep.subr.mxu0 0.0
  %1286 = vmatpush1.msra.mxu0 0.0
  %1287 = vmatprep.subr.mxu0 0.0
  %1288 = vmatpush1.msra.mxu0 0.0
  %1289 = vmatprep.subr.mxu0 0.0
  %1290 = vmatpush1.msra.mxu0 0.0
  %1291 = vmatprep.subr.mxu0 0.0
  %1292 = vmatpush1.msra.mxu0 0.0
  %1293 = vmatprep.subr.mxu0 0.0
  %1294 = vmatpush1.msra.mxu0 0.0
  %1295 = vmatprep.subr.mxu0 0.0
  %1296 = vmatpush1.msra.mxu0 0.0
  %1297 = vmatprep.subr.mxu0 0.0
  %1298 = vmatpush1.msra.mxu0 0.0
  %1299 = vmatprep.subr.mxu0 0.0
  %1300 = vmatpush1.msra.mxu0 0.0
  %1301 = vmatprep.subr.mxu0 0.0
  %1302 = vmatpush1.msra.mxu0 0.0
  %1303 = vmatprep.subr.mxu0 0.0
  %1304 = vmatpush1.msra.mxu0 0.0
  %1305 = vmatprep.subr.mxu0 0.0
  %1306 = vmatpush1.msra.mxu0 0.0
  %1307 = vmatprep.subr.mxu0 0.0
  %1308 = vmatpush1.msra.mxu0 0.0
  %1309 = vmatprep.subr.mxu0 0.0
  %1310 = vmatpush1.msra.mxu0 0.0
  %1311 = vmatprep.subr.mxu0 0.0
  %1312 = vmatpush1.msra.mxu0 0.0
  %1313 = vmatprep.subr.mxu0 0.0
  %1314 = vmatpush1.msra.mxu0 0.0
  %1315 = vmatprep.subr.mxu0 0.0
  %1316 = vmatpush1.msra.mxu0 0.0
  %1317 = vmatprep.subr.mxu0 0.0
  %1318 = vmatpush1.msra.mxu0 0.0
  %1319 = vmatprep.subr.mxu0 0.0
  %1320 = vmatpush1.msra.mxu0 0.0
  %1321 = vmatprep.subr.mxu0 0.0
  %1322 = vmatpush1.msra.mxu0 0.0
  %1323 = vmatprep.subr.mxu0 0.0
  %1324 = vmatpush1.msra.mxu0 0.0
  %1325 = vmatprep.subr.mxu0 0.0
  %1326 = vmatpush1.msra.mxu0 0.0
  %1327 = vmatprep.mubr.f32.mxu0 0.0
  %1328 = vmatmul.mubr.f32.gmra.mrb[0].mxu0 %v1255
  %v1329 = vpop.f32.mrb[0].mxu0
  %v1330 = vadd.f32 0.0, %v1329
  %v1331 = vpop.f32.mrb[0].mxu0
  %1332 = vmatprep.mubr.f32.mxu0 0.0
  %1333 = vmatmul.mubr.f32.gmra.mrb[0].mxu0 %v1258
  %v1334 = vpop.f32.mrb[0].mxu0
  %v1335 = vadd.f32 0.0, %v1334
  %v1336 = vpop.f32.mrb[0].mxu0
  %1337 = vmatprep.mubr.f32.mxu0 0.0
  %1338 = vmatmul.mubr.f32.gmra.mrb[0].mxu0 %v1261
  %v1339 = vpop.f32.mrb[0].mxu0
  %v1340 = vadd.f32 0.0, %v1339
  %v1341 = vpop.f32.mrb[0].mxu0
  %1342 = vdwg.mxu0
  %v1343 = vld [vmem:[%s9] sm:$0xff]
  %v1344 = vld [vmem:[%s9 + $0x8] sm:$0xff]
  %v1345 = vld [vmem:[%s9 + $0x10] sm:$0xff]
  %v1347 = vsel %vm1253, %v1343, 0
  %v1350 = vsel %vm1253, %v1344, 0
  %v1353 = vsel %vm1253, %v1345, 0
  %1355 = vmatprep.subr.mxu0 0.0
  %1356 = vmatpush1.msra.mxu0 %v1249
  %1357 = vmatprep.subr.mxu0 0.0
  %1358 = vmatpush1.msra.mxu0 0.0
  %1359 = vmatprep.subr.mxu0 0.0
  %1360 = vmatpush1.msra.mxu0 0.0
  %1361 = vmatprep.subr.mxu0 0.0
  %1362 = vmatpush1.msra.mxu0 0.0
  %1363 = vmatprep.subr.mxu0 0.0
  %1364 = vmatpush1.msra.mxu0 0.0
  %1365 = vmatprep.subr.mxu0 0.0
  %1366 = vmatpush1.msra.mxu0 0.0
  %1367 = vmatprep.subr.mxu0 0.0
  %1368 = vmatpush1.msra.mxu0 0.0
  %1369 = vmatprep.subr.mxu0 0.0
  %1370 = vmatpush1.msra.mxu0 0.0
  %1371 = vmatprep.subr.mxu0 0.0
  %1372 = vmatpush1.msra.mxu0 0.0
  %1373 = vmatprep.subr.mxu0 0.0
  %1374 = vmatpush1.msra.mxu0 0.0
  %1375 = vmatprep.subr.mxu0 0.0
  %1376 = vmatpush1.msra.mxu0 0.0
  %1377 = vmatprep.subr.mxu0 0.0
  %1378 = vmatpush1.msra.mxu0 0.0
  %1379 = vmatprep.subr.mxu0 0.0
  %1380 = vmatpush1.msra.mxu0 0.0
  %1381 = vmatprep.subr.mxu0 0.0
  %1382 = vmatpush1.msra.mxu0 0.0
  %1383 = vmatprep.subr.mxu0 0.0
  %1384 = vmatpush1.msra.mxu0 0.0
  %1385 = vmatprep.subr.mxu0 0.0
  %1386 = vmatpush1.msra.mxu0 0.0
  %1387 = vmatprep.subr.mxu0 0.0
  %1388 = vmatpush1.msra.mxu0 0.0
  %1389 = vmatprep.subr.mxu0 0.0
  %1390 = vmatpush1.msra.mxu0 0.0
  %1391 = vmatprep.subr.mxu0 0.0
  %1392 = vmatpush1.msra.mxu0 0.0
  %1393 = vmatprep.subr.mxu0 0.0
  %1394 = vmatpush1.msra.mxu0 0.0
  %1395 = vmatprep.subr.mxu0 0.0
  %1396 = vmatpush1.msra.mxu0 0.0
  %1397 = vmatprep.subr.mxu0 0.0
  %1398 = vmatpush1.msra.mxu0 0.0
  %1399 = vmatprep.subr.mxu0 0.0
  %1400 = vmatpush1.msra.mxu0 0.0
  %1401 = vmatprep.subr.mxu0 0.0
  %1402 = vmatpush1.msra.mxu0 0.0
  %1403 = vmatprep.subr.mxu0 0.0
  %1404 = vmatpush1.msra.mxu0 0.0
  %1405 = vmatprep.subr.mxu0 0.0
  %1406 = vmatpush1.msra.mxu0 0.0
  %1407 = vmatprep.subr.mxu0 0.0
  %1408 = vmatpush1.msra.mxu0 0.0
  %1409 = vmatprep.subr.mxu0 0.0
  %1410 = vmatpush1.msra.mxu0 0.0
  %1411 = vmatprep.subr.mxu0 0.0
  %1412 = vmatpush1.msra.mxu0 0.0
  %1413 = vmatprep.subr.mxu0 0.0
  %1414 = vmatpush1.msra.mxu0 0.0
  %1415 = vmatprep.subr.mxu0 0.0
  %1416 = vmatpush1.msra.mxu0 0.0
  %1417 = vmatprep.subr.mxu0 0.0
  %1418 = vmatpush1.msra.mxu0 0.0
  %1419 = vmatprep.mubr.f32.mxu0 0.0
  %1420 = vmatmul.mubr.f32.gmra.mrb[0].mxu0 %v1347
  %v1421 = vpop.f32.mrb[0].mxu0
  %v1422 = vadd.f32 0.0, %v1421
  %v1423 = vpop.f32.mrb[0].mxu0
  %1424 = vmatprep.mubr.f32.mxu0 0.0
  %1425 = vmatmul.mubr.f32.gmra.mrb[0].mxu0 %v1350
  %v1426 = vpop.f32.mrb[0].mxu0
  %v1427 = vadd.f32 0.0, %v1426
  %v1428 = vpop.f32.mrb[0].mxu0
  %1429 = vmatprep.mubr.f32.mxu0 0.0
  %1430 = vmatmul.mubr.f32.gmra.mrb[0].mxu0 %v1353
  %v1431 = vpop.f32.mrb[0].mxu0
  %v1432 = vadd.f32 0.0, %v1431
  %v1433 = vpop.f32.mrb[0].mxu0
  %1434 = vdwg.mxu0
  %v1435 = vld [vmem:[%s11] sm:$0xff]
  %v1436 = vld [vmem:[%s11 + $0x8] sm:$0xff]
  %v1437 = vld [vmem:[%s11 + $0x10] sm:$0xff]
  %v1438 = vld [vmem:[%s11 + $0x18] sm:$0xff]
  %v1439 = vld [vmem:[%s12] sm:$0xff]
  %v1440 = vld [vmem:[%s12 + $0x8] sm:$0xff]
  %v1441 = vld [vmem:[%s12 + $0x10] sm:$0xff]
  %v1442 = vld [vmem:[%s12 + $0x18] sm:$0xff]
  %v1444 = vsel %vm381, %v1422, 0
  %v1447 = vsel %vm381, %v1427, 0
  %v1450 = vsel %vm381, %v1432, 0
  %1452 = vmatprep.subr.mxu0 0.0
  %1453 = vmatpush1.msra.mxu0 %v1439
  %1454 = vmatprep.subr.mxu0 0.0
  %1455 = vmatpush1.msra.mxu0 %v1440
  %1456 = vmatprep.subr.mxu0 0.0
  %1457 = vmatpush1.msra.mxu0 %v1441
  %1458 = vmatprep.subr.mxu0 0.0
  %1459 = vmatpush1.msra.mxu0 %v1442
  %1460 = vmatprep.subr.mxu0 0.0
  %1461 = vmatpush1.msra.mxu0 0.0
  %1462 = vmatprep.subr.mxu0 0.0
  %1463 = vmatpush1.msra.mxu0 0.0
  %1464 = vmatprep.subr.mxu0 0.0
  %1465 = vmatpush1.msra.mxu0 0.0
  %1466 = vmatprep.subr.mxu0 0.0
  %1467 = vmatpush1.msra.mxu0 0.0
  %1468 = vmatprep.subr.mxu0 0.0
  %1469 = vmatpush1.msra.mxu0 0.0
  %1470 = vmatprep.subr.mxu0 0.0
  %1471 = vmatpush1.msra.mxu0 0.0
  %1472 = vmatprep.subr.mxu0 0.0
  %1473 = vmatpush1.msra.mxu0 0.0
  %1474 = vmatprep.subr.mxu0 0.0
  %1475 = vmatpush1.msra.mxu0 0.0
  %1476 = vmatprep.subr.mxu0 0.0
  %1477 = vmatpush1.msra.mxu0 0.0
  %1478 = vmatprep.subr.mxu0 0.0
  %1479 = vmatpush1.msra.mxu0 0.0
  %1480 = vmatprep.subr.mxu0 0.0
  %1481 = vmatpush1.msra.mxu0 0.0
  %1482 = vmatprep.subr.mxu0 0.0
  %1483 = vmatpush1.msra.mxu0 0.0
  %1484 = vmatprep.subr.mxu0 0.0
  %1485 = vmatpush1.msra.mxu0 0.0
  %1486 = vmatprep.subr.mxu0 0.0
  %1487 = vmatpush1.msra.mxu0 0.0
  %1488 = vmatprep.subr.mxu0 0.0
  %1489 = vmatpush1.msra.mxu0 0.0
  %1490 = vmatprep.subr.mxu0 0.0
  %1491 = vmatpush1.msra.mxu0 0.0
  %1492 = vmatprep.subr.mxu0 0.0
  %1493 = vmatpush1.msra.mxu0 0.0
  %1494 = vmatprep.subr.mxu0 0.0
  %1495 = vmatpush1.msra.mxu0 0.0
  %1496 = vmatprep.subr.mxu0 0.0
  %1497 = vmatpush1.msra.mxu0 0.0
  %1498 = vmatprep.subr.mxu0 0.0
  %1499 = vmatpush1.msra.mxu0 0.0
  %1500 = vmatprep.subr.mxu0 0.0
  %1501 = vmatpush1.msra.mxu0 0.0
  %1502 = vmatprep.subr.mxu0 0.0
  %1503 = vmatpush1.msra.mxu0 0.0
  %1504 = vmatprep.subr.mxu0 0.0
  %1505 = vmatpush1.msra.mxu0 0.0
  %1506 = vmatprep.subr.mxu0 0.0
  %1507 = vmatpush1.msra.mxu0 0.0
  %1508 = vmatprep.subr.mxu0 0.0
  %1509 = vmatpush1.msra.mxu0 0.0
  %1510 = vmatprep.subr.mxu0 0.0
  %1511 = vmatpush1.msra.mxu0 0.0
  %1512 = vmatprep.subr.mxu0 0.0
  %1513 = vmatpush1.msra.mxu0 0.0
  %1514 = vmatprep.subr.mxu0 0.0
  %1515 = vmatpush1.msra.mxu0 0.0
  %1516 = vmatprep.mubr.f32.mxu0 0.0
  %1517 = vmatmul.mubr.f32.gmra.mrb[0].mxu0 %v1444
  %v1518 = vpop.f32.mrb[0].mxu0
  %v1519 = vadd.f32 0.0, %v1518
  %v1520 = vpop.f32.mrb[0].mxu0
  %1521 = vmatprep.mubr.f32.mxu0 0.0
  %1522 = vmatmul.mubr.f32.gmra.mrb[0].mxu0 %v1447
  %v1523 = vpop.f32.mrb[0].mxu0
  %v1524 = vadd.f32 0.0, %v1523
  %v1525 = vpop.f32.mrb[0].mxu0
  %1526 = vmatprep.mubr.f32.mxu0 0.0
  %1527 = vmatmul.mubr.f32.gmra.mrb[0].mxu0 %v1450
  %v1528 = vpop.f32.mrb[0].mxu0
  %v1529 = vadd.f32 0.0, %v1528
  %v1530 = vpop.f32.mrb[0].mxu0
  %1531 = vdwg.mxu0
  %v1533 = vsel %vm381, %v1330, 0
  %v1536 = vsel %vm381, %v1335, 0
  %v1539 = vsel %vm381, %v1340, 0
  %1541 = vmatprep.subr.mxu0 0.0
  %1542 = vmatpush1.msra.mxu0 %v1435
  %1543 = vmatprep.subr.mxu0 0.0
  %1544 = vmatpush1.msra.mxu0 %v1436
  %1545 = vmatprep.subr.mxu0 0.0
  %1546 = vmatpush1.msra.mxu0 %v1437
  %1547 = vmatprep.subr.mxu0 0.0
  %1548 = vmatpush1.msra.mxu0 %v1438
  %1549 = vmatprep.subr.mxu0 0.0
  %1550 = vmatpush1.msra.mxu0 0.0
  %1551 = vmatprep.subr.mxu0 0.0
  %1552 = vmatpush1.msra.mxu0 0.0
  %1553 = vmatprep.subr.mxu0 0.0
  %1554 = vmatpush1.msra.mxu0 0.0
  %1555 = vmatprep.subr.mxu0 0.0
  %1556 = vmatpush1.msra.mxu0 0.0
  %1557 = vmatprep.subr.mxu0 0.0
  %1558 = vmatpush1.msra.mxu0 0.0
  %1559 = vmatprep.subr.mxu0 0.0
  %1560 = vmatpush1.msra.mxu0 0.0
  %1561 = vmatprep.subr.mxu0 0.0
  %1562 = vmatpush1.msra.mxu0 0.0
  %1563 = vmatprep.subr.mxu0 0.0
  %1564 = vmatpush1.msra.mxu0 0.0
  %1565 = vmatprep.subr.mxu0 0.0
  %1566 = vmatpush1.msra.mxu0 0.0
  %1567 = vmatprep.subr.mxu0 0.0
  %1568 = vmatpush1.msra.mxu0 0.0
  %1569 = vmatprep.subr.mxu0 0.0
  %1570 = vmatpush1.msra.mxu0 0.0
  %1571 = vmatprep.subr.mxu0 0.0
  %1572 = vmatpush1.msra.mxu0 0.0
  %1573 = vmatprep.subr.mxu0 0.0
  %1574 = vmatpush1.msra.mxu0 0.0
  %1575 = vmatprep.subr.mxu0 0.0
  %1576 = vmatpush1.msra.mxu0 0.0
  %1577 = vmatprep.subr.mxu0 0.0
  %1578 = vmatpush1.msra.mxu0 0.0
  %1579 = vmatprep.subr.mxu0 0.0
  %1580 = vmatpush1.msra.mxu0 0.0
  %1581 = vmatprep.subr.mxu0 0.0
  %1582 = vmatpush1.msra.mxu0 0.0
  %1583 = vmatprep.subr.mxu0 0.0
  %1584 = vmatpush1.msra.mxu0 0.0
  %1585 = vmatprep.subr.mxu0 0.0
  %1586 = vmatpush1.msra.mxu0 0.0
  %1587 = vmatprep.subr.mxu0 0.0
  %1588 = vmatpush1.msra.mxu0 0.0
  %1589 = vmatprep.subr.mxu0 0.0
  %1590 = vmatpush1.msra.mxu0 0.0
  %1591 = vmatprep.subr.mxu0 0.0
  %1592 = vmatpush1.msra.mxu0 0.0
  %1593 = vmatprep.subr.mxu0 0.0
  %1594 = vmatpush1.msra.mxu0 0.0
  %1595 = vmatprep.subr.mxu0 0.0
  %1596 = vmatpush1.msra.mxu0 0.0
  %1597 = vmatprep.subr.mxu0 0.0
  %1598 = vmatpush1.msra.mxu0 0.0
  %1599 = vmatprep.subr.mxu0 0.0
  %1600 = vmatpush1.msra.mxu0 0.0
  %1601 = vmatprep.subr.mxu0 0.0
  %1602 = vmatpush1.msra.mxu0 0.0
  %1603 = vmatprep.subr.mxu0 0.0
  %1604 = vmatpush1.msra.mxu0 0.0
  %1605 = vmatprep.mubr.f32.mxu0 0.0
  %1606 = vmatmul.mubr.f32.gmra.mrb[0].mxu0 %v1533
  %v1607 = vpop.f32.mrb[0].mxu0
  %v1608 = vadd.f32 %v1519, %v1607
  %v1609 = vpop.f32.mrb[0].mxu0
  %1610 = vmatprep.mubr.f32.mxu0 0.0
  %1611 = vmatmul.mubr.f32.gmra.mrb[0].mxu0 %v1536
  %v1612 = vpop.f32.mrb[0].mxu0
  %v1613 = vadd.f32 %v1524, %v1612
  %v1614 = vpop.f32.mrb[0].mxu0
  %1615 = vmatprep.mubr.f32.mxu0 0.0
  %1616 = vmatmul.mubr.f32.gmra.mrb[0].mxu0 %v1539
  %v1617 = vpop.f32.mrb[0].mxu0
  %v1618 = vadd.f32 %v1529, %v1617
  %v1619 = vpop.f32.mrb[0].mxu0
  %1620 = vdwg.mxu0
  %v1621 = vld [vmem:[%s13] sm:$0x1]
  %v1623 = vlaneseq
  %v1624 = vshrl.u32 %v1623, 7
  %v1625 = vsub.s32 0, %v1624
  %v1626 = vrot.slane %v1621, %v1625
  %v1628 = vadd.f32 %v1608, %v1626
  %v1629 = vadd.f32 %v1613, %v1626
  %v1630 = vadd.f32 %v1618, %v1626
  %v1631 = vld [vmem:[%s10] sm:$0xff]
  %v1632 = vld [vmem:[%s10 + $0x8] sm:$0xff]
  %v1633 = vld [vmem:[%s10 + $0x10] sm:$0xff]
  %v1634 = vld [vmem:[%s14] sm:$0xff]
  %v1635 = vld [vmem:[%s14 + $0x8] sm:$0xff]
  %v1636 = vld [vmem:[%s14 + $0x10] sm:$0xff]
  %v1637 = vld [vmem:[%s14 + $0x18] sm:$0xff]
  %v1638 = vld [vmem:[%s15] sm:$0x1]
  %1639 = vmatprep.subr.mxu0 0.0
  %1640 = vmatpush1.msra.mxu0 %v1634
  %1641 = vmatprep.subr.mxu0 0.0
  %1642 = vmatpush1.msra.mxu0 %v1635
  %1643 = vmatprep.subr.mxu0 0.0
  %1644 = vmatpush1.msra.mxu0 %v1636
  %1645 = vmatprep.subr.mxu0 0.0
  %1646 = vmatpush1.msra.mxu0 %v1637
  %1647 = vmatprep.subr.mxu0 0.0
  %1648 = vmatpush1.msra.mxu0 0.0
  %1649 = vmatprep.subr.mxu0 0.0
  %1650 = vmatpush1.msra.mxu0 0.0
  %1651 = vmatprep.subr.mxu0 0.0
  %1652 = vmatpush1.msra.mxu0 0.0
  %1653 = vmatprep.subr.mxu0 0.0
  %1654 = vmatpush1.msra.mxu0 0.0
  %1655 = vmatprep.subr.mxu0 0.0
  %1656 = vmatpush1.msra.mxu0 0.0
  %1657 = vmatprep.subr.mxu0 0.0
  %1658 = vmatpush1.msra.mxu0 0.0
  %1659 = vmatprep.subr.mxu0 0.0
  %1660 = vmatpush1.msra.mxu0 0.0
  %1661 = vmatprep.subr.mxu0 0.0
  %1662 = vmatpush1.msra.mxu0 0.0
  %1663 = vmatprep.subr.mxu0 0.0
  %1664 = vmatpush1.msra.mxu0 0.0
  %1665 = vmatprep.subr.mxu0 0.0
  %1666 = vmatpush1.msra.mxu0 0.0
  %1667 = vmatprep.subr.mxu0 0.0
  %1668 = vmatpush1.msra.mxu0 0.0
  %1669 = vmatprep.subr.mxu0 0.0
  %1670 = vmatpush1.msra.mxu0 0.0
  %1671 = vmatprep.subr.mxu0 0.0
  %1672 = vmatpush1.msra.mxu0 0.0
  %1673 = vmatprep.subr.mxu0 0.0
  %1674 = vmatpush1.msra.mxu0 0.0
  %1675 = vmatprep.subr.mxu0 0.0
  %1676 = vmatpush1.msra.mxu0 0.0
  %1677 = vmatprep.subr.mxu0 0.0
  %1678 = vmatpush1.msra.mxu0 0.0
  %1679 = vmatprep.subr.mxu0 0.0
  %1680 = vmatpush1.msra.mxu0 0.0
  %1681 = vmatprep.subr.mxu0 0.0
  %1682 = vmatpush1.msra.mxu0 0.0
  %1683 = vmatprep.subr.mxu0 0.0
  %1684 = vmatpush1.msra.mxu0 0.0
  %1685 = vmatprep.subr.mxu0 0.0
  %1686 = vmatpush1.msra.mxu0 0.0
  %1687 = vmatprep.subr.mxu0 0.0
  %1688 = vmatpush1.msra.mxu0 0.0
  %1689 = vmatprep.subr.mxu0 0.0
  %1690 = vmatpush1.msra.mxu0 0.0
  %1691 = vmatprep.subr.mxu0 0.0
  %1692 = vmatpush1.msra.mxu0 0.0
  %1693 = vmatprep.subr.mxu0 0.0
  %1694 = vmatpush1.msra.mxu0 0.0
  %1695 = vmatprep.subr.mxu0 0.0
  %1696 = vmatpush1.msra.mxu0 0.0
  %1697 = vmatprep.subr.mxu0 0.0
  %1698 = vmatpush1.msra.mxu0 0.0
  %1699 = vmatprep.subr.mxu0 0.0
  %1700 = vmatpush1.msra.mxu0 0.0
  %1701 = vmatprep.subr.mxu0 0.0
  %1702 = vmatpush1.msra.mxu0 0.0
  %1703 = vmatprep.mubr.f32.mxu0 0.0
  %1704 = vmatmul.mubr.f32.gmra.mrb[0].mxu0 %v383
  %v1705 = vpop.f32.mrb[0].mxu0
  %v1706 = vadd.f32 0.0, %v1705
  %v1707 = vpop.f32.mrb[0].mxu0
  %1708 = vdwg.mxu0
  %v1709 = vadd.f32 %v1628, %v1706
  %v1710 = vxor.u32 %v1709, 2147483648
  %v1711 = vmul.f32 %v1710, 1.442695
  %v1712 = vpow.pop %v1711
  %v1713 = vadd.f32 %v1712, 1.0
  %v1714 = vrcp.pop %v1713
  %v1715 = vmul.f32 1.0, %v1714
  %v1717 = vlaneseq
  %v1718 = vshrl.u32 %v1717, 7
  %v1719 = vsub.s32 0, %v1718
  %v1720 = vrot.slane %v1638, %v1719
  %1721 = vrot.lane.b32.xlu0 %v1720, 64
  %v1722 = vpop.permute.xlu0 %1721
  %v1724 = vadd.f32 %v1706, %v1722
  %1726 = vrot.lane.b32.xlu0 %v1724, 64
  %v1727 = vpop.permute.xlu0 %1726
  %v1729 = vmul.f32 %v1715, %v1727
  %1731 = vrot.lane.b32.xlu0 %v1729, 64
  %v1732 = vpop.permute.xlu0 %1731
  %v1734 = vadd.f32 %v1628, %v1732
  %v1735 = vtanh.pop %v1734
  %v1736 = vsub.f32 1.0, %v1715
  %1738 = vrot.lane.b32.xlu0 %v1736, 96
  %v1739 = vpop.permute.xlu0 %1738
  %v1741 = vmul.f32 %v1631, %v1739
  %1743 = vrot.lane.b32.xlu0 %v1735, 64
  %v1744 = vpop.permute.xlu0 %1743
  %v1746 = vmul.f32 %v1741, %v1744
  %v1747 = vadd.f32 %v1746, 0.0
  %v1749 = vsel %vm381, %v1747, 0
  %1751 = vmatprep.subr.mxu0 0.0
  %1752 = vmatpush1.msra.mxu0 %v1634
  %1753 = vmatprep.subr.mxu0 0.0
  %1754 = vmatpush1.msra.mxu0 %v1635
  %1755 = vmatprep.subr.mxu0 0.0
  %1756 = vmatpush1.msra.mxu0 %v1636
  %1757 = vmatprep.subr.mxu0 0.0
  %1758 = vmatpush1.msra.mxu0 %v1637
  %1759 = vmatprep.subr.mxu0 0.0
  %1760 = vmatpush1.msra.mxu0 0.0
  %1761 = vmatprep.subr.mxu0 0.0
  %1762 = vmatpush1.msra.mxu0 0.0
  %1763 = vmatprep.subr.mxu0 0.0
  %1764 = vmatpush1.msra.mxu0 0.0
  %1765 = vmatprep.subr.mxu0 0.0
  %1766 = vmatpush1.msra.mxu0 0.0
  %1767 = vmatprep.subr.mxu0 0.0
  %1768 = vmatpush1.msra.mxu0 0.0
  %1769 = vmatprep.subr.mxu0 0.0
  %1770 = vmatpush1.msra.mxu0 0.0
  %1771 = vmatprep.subr.mxu0 0.0
  %1772 = vmatpush1.msra.mxu0 0.0
  %1773 = vmatprep.subr.mxu0 0.0
  %1774 = vmatpush1.msra.mxu0 0.0
  %1775 = vmatprep.subr.mxu0 0.0
  %1776 = vmatpush1.msra.mxu0 0.0
  %1777 = vmatprep.subr.mxu0 0.0
  %1778 = vmatpush1.msra.mxu0 0.0
  %1779 = vmatprep.subr.mxu0 0.0
  %1780 = vmatpush1.msra.mxu0 0.0
  %1781 = vmatprep.subr.mxu0 0.0
  %1782 = vmatpush1.msra.mxu0 0.0
  %1783 = vmatprep.subr.mxu0 0.0
  %1784 = vmatpush1.msra.mxu0 0.0
  %1785 = vmatprep.subr.mxu0 0.0
  %1786 = vmatpush1.msra.mxu0 0.0
  %1787 = vmatprep.subr.mxu0 0.0
  %1788 = vmatpush1.msra.mxu0 0.0
  %1789 = vmatprep.subr.mxu0 0.0
  %1790 = vmatpush1.msra.mxu0 0.0
  %1791 = vmatprep.subr.mxu0 0.0
  %1792 = vmatpush1.msra.mxu0 0.0
  %1793 = vmatprep.subr.mxu0 0.0
  %1794 = vmatpush1.msra.mxu0 0.0
  %1795 = vmatprep.subr.mxu0 0.0
  %1796 = vmatpush1.msra.mxu0 0.0
  %1797 = vmatprep.subr.mxu0 0.0
  %1798 = vmatpush1.msra.mxu0 0.0
  %1799 = vmatprep.subr.mxu0 0.0
  %1800 = vmatpush1.msra.mxu0 0.0
  %1801 = vmatprep.subr.mxu0 0.0
  %1802 = vmatpush1.msra.mxu0 0.0
  %1803 = vmatprep.subr.mxu0 0.0
  %1804 = vmatpush1.msra.mxu0 0.0
  %1805 = vmatprep.subr.mxu0 0.0
  %1806 = vmatpush1.msra.mxu0 0.0
  %1807 = vmatprep.subr.mxu0 0.0
  %1808 = vmatpush1.msra.mxu0 0.0
  %1809 = vmatprep.subr.mxu0 0.0
  %1810 = vmatpush1.msra.mxu0 0.0
  %1811 = vmatprep.subr.mxu0 0.0
  %1812 = vmatpush1.msra.mxu0 0.0
  %1813 = vmatprep.subr.mxu0 0.0
  %1814 = vmatpush1.msra.mxu0 0.0
  %1815 = vmatprep.mubr.f32.mxu0 0.0
  %1816 = vmatmul.mubr.f32.gmra.mrb[0].mxu0 %v1749
  %v1817 = vpop.f32.mrb[0].mxu0
  %v1818 = vadd.f32 0.0, %v1817
  %v1819 = vpop.f32.mrb[0].mxu0
  %1820 = vdwg.mxu0
  %v1821 = vadd.f32 %v1629, %v1818
  %v1822 = vxor.u32 %v1821, 2147483648
  %v1823 = vmul.f32 %v1822, 1.442695
  %v1824 = vpow.pop %v1823
  %v1825 = vadd.f32 %v1824, 1.0
  %v1826 = vrcp.pop %v1825
  %v1827 = vmul.f32 1.0, %v1826
  %v1828 = vadd.f32 %v1818, %v1722
  %1830 = vrot.lane.b32.xlu0 %v1828, 64
  %v1831 = vpop.permute.xlu0 %1830
  %v1833 = vmul.f32 %v1827, %v1831
  %1835 = vrot.lane.b32.xlu0 %v1833, 64
  %v1836 = vpop.permute.xlu0 %1835
  %v1838 = vadd.f32 %v1629, %v1836
  %v1839 = vtanh.pop %v1838
  %v1840 = vsub.f32 1.0, %v1827
  %1842 = vrot.lane.b32.xlu0 %v1840, 96
  %v1843 = vpop.permute.xlu0 %1842
  %v1845 = vmul.f32 %v1632, %v1843
  %1846 = vrot.lane.b32.xlu0 %v1747, 64
  %v1847 = vpop.permute.xlu0 %1846
  %v1849 = vsub.f32 %v1839, %v1847
  %1851 = vrot.lane.b32.xlu0 %v1849, 64
  %v1852 = vpop.permute.xlu0 %1851
  %v1854 = vmul.f32 %v1845, %v1852
  %v1855 = vadd.f32 %v1747, %v1854
  %v1857 = vsel %vm381, %v1855, 0
  %1859 = vmatprep.subr.mxu0 0.0
  %1860 = vmatpush1.msra.mxu0 %v1634
  %1861 = vmatprep.subr.mxu0 0.0
  %1862 = vmatpush1.msra.mxu0 %v1635
  %1863 = vmatprep.subr.mxu0 0.0
  %1864 = vmatpush1.msra.mxu0 %v1636
  %1865 = vmatprep.subr.mxu0 0.0
  %1866 = vmatpush1.msra.mxu0 %v1637
  %1867 = vmatprep.subr.mxu0 0.0
  %1868 = vmatpush1.msra.mxu0 0.0
  %1869 = vmatprep.subr.mxu0 0.0
  %1870 = vmatpush1.msra.mxu0 0.0
  %1871 = vmatprep.subr.mxu0 0.0
  %1872 = vmatpush1.msra.mxu0 0.0
  %1873 = vmatprep.subr.mxu0 0.0
  %1874 = vmatpush1.msra.mxu0 0.0
  %1875 = vmatprep.subr.mxu0 0.0
  %1876 = vmatpush1.msra.mxu0 0.0
  %1877 = vmatprep.subr.mxu0 0.0
  %1878 = vmatpush1.msra.mxu0 0.0
  %1879 = vmatprep.subr.mxu0 0.0
  %1880 = vmatpush1.msra.mxu0 0.0
  %1881 = vmatprep.subr.mxu0 0.0
  %1882 = vmatpush1.msra.mxu0 0.0
  %1883 = vmatprep.subr.mxu0 0.0
  %1884 = vmatpush1.msra.mxu0 0.0
  %1885 = vmatprep.subr.mxu0 0.0
  %1886 = vmatpush1.msra.mxu0 0.0
  %1887 = vmatprep.subr.mxu0 0.0
  %1888 = vmatpush1.msra.mxu0 0.0
  %1889 = vmatprep.subr.mxu0 0.0
  %1890 = vmatpush1.msra.mxu0 0.0
  %1891 = vmatprep.subr.mxu0 0.0
  %1892 = vmatpush1.msra.mxu0 0.0
  %1893 = vmatprep.subr.mxu0 0.0
  %1894 = vmatpush1.msra.mxu0 0.0
  %1895 = vmatprep.subr.mxu0 0.0
  %1896 = vmatpush1.msra.mxu0 0.0
  %1897 = vmatprep.subr.mxu0 0.0
  %1898 = vmatpush1.msra.mxu0 0.0
  %1899 = vmatprep.subr.mxu0 0.0
  %1900 = vmatpush1.msra.mxu0 0.0
  %1901 = vmatprep.subr.mxu0 0.0
  %1902 = vmatpush1.msra.mxu0 0.0
  %1903 = vmatprep.subr.mxu0 0.0
  %1904 = vmatpush1.msra.mxu0 0.0
  %1905 = vmatprep.subr.mxu0 0.0
  %1906 = vmatpush1.msra.mxu0 0.0
  %1907 = vmatprep.subr.mxu0 0.0
  %1908 = vmatpush1.msra.mxu0 0.0
  %1909 = vmatprep.subr.mxu0 0.0
  %1910 = vmatpush1.msra.mxu0 0.0
  %1911 = vmatprep.subr.mxu0 0.0
  %1912 = vmatpush1.msra.mxu0 0.0
  %1913 = vmatprep.subr.mxu0 0.0
  %1914 = vmatpush1.msra.mxu0 0.0
  %1915 = vmatprep.subr.mxu0 0.0
  %1916 = vmatpush1.msra.mxu0 0.0
  %1917 = vmatprep.subr.mxu0 0.0
  %1918 = vmatpush1.msra.mxu0 0.0
  %1919 = vmatprep.subr.mxu0 0.0
  %1920 = vmatpush1.msra.mxu0 0.0
  %1921 = vmatprep.subr.mxu0 0.0
  %1922 = vmatpush1.msra.mxu0 0.0
  %1923 = vmatprep.mubr.f32.mxu0 0.0
  %1924 = vmatmul.mubr.f32.gmra.mrb[0].mxu0 %v1857
  %v1925 = vpop.f32.mrb[0].mxu0
  %v1926 = vadd.f32 0.0, %v1925
  %v1927 = vpop.f32.mrb[0].mxu0
  %1928 = vdwg.mxu0
  %v1929 = vadd.f32 %v1630, %v1926
  %v1930 = vxor.u32 %v1929, 2147483648
  %v1931 = vmul.f32 %v1930, 1.442695
  %v1932 = vpow.pop %v1931
  %v1933 = vadd.f32 %v1932, 1.0
  %v1934 = vrcp.pop %v1933
  %v1935 = vmul.f32 1.0, %v1934
  %v1936 = vadd.f32 %v1926, %v1722
  %1938 = vrot.lane.b32.xlu0 %v1936, 64
  %v1939 = vpop.permute.xlu0 %1938
  %v1941 = vmul.f32 %v1935, %v1939
  %1943 = vrot.lane.b32.xlu0 %v1941, 64
  %v1944 = vpop.permute.xlu0 %1943
  %v1946 = vadd.f32 %v1630, %v1944
  %v1947 = vtanh.pop %v1946
  %v1948 = vsub.f32 1.0, %v1935
  %1950 = vrot.lane.b32.xlu0 %v1948, 96
  %v1951 = vpop.permute.xlu0 %1950
  %v1953 = vmul.f32 %v1633, %v1951
  %1954 = vrot.lane.b32.xlu0 %v1855, 64
  %v1955 = vpop.permute.xlu0 %1954
  %v1957 = vsub.f32 %v1947, %v1955
  %1959 = vrot.lane.b32.xlu0 %v1957, 64
  %v1960 = vpop.permute.xlu0 %1959
  %v1962 = vmul.f32 %v1953, %v1960
  %v1963 = vadd.f32 %v1855, %v1962
  %v1964 = vld [vmem:[%s16] sm:$0xff]
  %v1965 = vld [vmem:[%s16 + $0x8] sm:$0xff]
  %v1966 = vld [vmem:[%s16 + $0x10] sm:$0xff]
  %v1967 = vld [vmem:[%s16 + $0x18] sm:$0xff]
  %v1968 = vld [vmem:[%s18] sm:$0xff]
  %v1969 = vld [vmem:[%s18 + $0x8] sm:$0xff]
  %v1970 = vld [vmem:[%s18 + $0x10] sm:$0xff]
  %v1971 = vld [vmem:[%s18 + $0x18] sm:$0xff]
  %v1972 = vld [vmem:[%s19] sm:$0x1]
  %v1974 = vlaneseq
  %v1975 = vshrl.u32 %v1974, 7
  %v1976 = vsub.s32 0, %v1975
  %v1977 = vrot.slane %v1972, %v1976
  %v1980 = vsel %vm381, %v1964, 0
  %v1983 = vsel %vm381, %v1965, 0
  %v1986 = vsel %vm381, %v1966, 0
  %v1989 = vsel %vm381, %v1967, 0
  %1991 = vmatprep.subr.mxu0 0.0
  %1992 = vmatpush1.msra.mxu0 %v1968
  %1993 = vmatprep.subr.mxu0 0.0
  %1994 = vmatpush1.msra.mxu0 %v1969
  %1995 = vmatprep.subr.mxu0 0.0
  %1996 = vmatpush1.msra.mxu0 %v1970
  %1997 = vmatprep.subr.mxu0 0.0
  %1998 = vmatpush1.msra.mxu0 %v1971
  %1999 = vmatprep.subr.mxu0 0.0
  %2000 = vmatpush1.msra.mxu0 0.0
  %2001 = vmatprep.subr.mxu0 0.0
  %2002 = vmatpush1.msra.mxu0 0.0
  %2003 = vmatprep.subr.mxu0 0.0
  %2004 = vmatpush1.msra.mxu0 0.0
  %2005 = vmatprep.subr.mxu0 0.0
  %2006 = vmatpush1.msra.mxu0 0.0
  %2007 = vmatprep.subr.mxu0 0.0
  %2008 = vmatpush1.msra.mxu0 0.0
  %2009 = vmatprep.subr.mxu0 0.0
  %2010 = vmatpush1.msra.mxu0 0.0
  %2011 = vmatprep.subr.mxu0 0.0
  %2012 = vmatpush1.msra.mxu0 0.0
  %2013 = vmatprep.subr.mxu0 0.0
  %2014 = vmatpush1.msra.mxu0 0.0
  %2015 = vmatprep.subr.mxu0 0.0
  %2016 = vmatpush1.msra.mxu0 0.0
  %2017 = vmatprep.subr.mxu0 0.0
  %2018 = vmatpush1.msra.mxu0 0.0
  %2019 = vmatprep.subr.mxu0 0.0
  %2020 = vmatpush1.msra.mxu0 0.0
  %2021 = vmatprep.subr.mxu0 0.0
  %2022 = vmatpush1.msra.mxu0 0.0
  %2023 = vmatprep.subr.mxu0 0.0
  %2024 = vmatpush1.msra.mxu0 0.0
  %2025 = vmatprep.subr.mxu0 0.0
  %2026 = vmatpush1.msra.mxu0 0.0
  %2027 = vmatprep.subr.mxu0 0.0
  %2028 = vmatpush1.msra.mxu0 0.0
  %2029 = vmatprep.subr.mxu0 0.0
  %2030 = vmatpush1.msra.mxu0 0.0
  %2031 = vmatprep.subr.mxu0 0.0
  %2032 = vmatpush1.msra.mxu0 0.0
  %2033 = vmatprep.subr.mxu0 0.0
  %2034 = vmatpush1.msra.mxu0 0.0
  %2035 = vmatprep.subr.mxu0 0.0
  %2036 = vmatpush1.msra.mxu0 0.0
  %2037 = vmatprep.subr.mxu0 0.0
  %2038 = vmatpush1.msra.mxu0 0.0
  %2039 = vmatprep.subr.mxu0 0.0
  %2040 = vmatpush1.msra.mxu0 0.0
  %2041 = vmatprep.subr.mxu0 0.0
  %2042 = vmatpush1.msra.mxu0 0.0
  %2043 = vmatprep.subr.mxu0 0.0
  %2044 = vmatpush1.msra.mxu0 0.0
  %2045 = vmatprep.subr.mxu0 0.0
  %2046 = vmatpush1.msra.mxu0 0.0
  %2047 = vmatprep.subr.mxu0 0.0
  %2048 = vmatpush1.msra.mxu0 0.0
  %2049 = vmatprep.subr.mxu0 0.0
  %2050 = vmatpush1.msra.mxu0 0.0
  %2051 = vmatprep.subr.mxu0 0.0
  %2052 = vmatpush1.msra.mxu0 0.0
  %2053 = vmatprep.subr.mxu0 0.0
  %2054 = vmatpush1.msra.mxu0 0.0
  %2055 = vmatprep.mubr.f32.mxu0 0.0
  %2056 = vmatmul.mubr.f32.gmra.mrb[0].mxu0 %v1980
  %v2057 = vpop.f32.mrb[0].mxu0
  %v2058 = vadd.f32 %v1977, %v2057
  %v2059 = vpop.f32.mrb[0].mxu0
  %2060 = vmatprep.mubr.f32.mxu0 0.0
  %2061 = vmatmul.mubr.f32.gmra.mrb[0].mxu0 %v1983
  %v2062 = vpop.f32.mrb[0].mxu0
  %v2063 = vadd.f32 %v1977, %v2062
  %v2064 = vpop.f32.mrb[0].mxu0
  %2065 = vmatprep.mubr.f32.mxu0 0.0
  %2066 = vmatmul.mubr.f32.gmra.mrb[0].mxu0 %v1986
  %v2067 = vpop.f32.mrb[0].mxu0
  %v2068 = vadd.f32 %v1977, %v2067
  %v2069 = vpop.f32.mrb[0].mxu0
  %2070 = vmatprep.mubr.f32.mxu0 0.0
  %2071 = vmatmul.mubr.f32.gmra.mrb[0].mxu0 %v1989
  %v2072 = vpop.f32.mrb[0].mxu0
  %v2073 = vadd.f32 %v1977, %v2072
  %v2074 = vpop.f32.mrb[0].mxu0
  %2075 = vdwg.mxu0
  %v2076 = vmax.f32 %v2058, 0.0
  %v2077 = vmax.f32 %v2063, 0.0
  %v2078 = vmax.f32 %v2068, 0.0
  %v2079 = vmax.f32 %v2073, 0.0
  %v2080 = vld [vmem:[%s17] sm:$0xff]
  %v2082 = vsel %vm381, %v2080, 0
  %2084 = vmatprep.subr.mxu0 0.0
  %2085 = vmatpush1.msra.mxu0 %v2076
  %2086 = vmatprep.subr.mxu0 0.0
  %2087 = vmatpush1.msra.mxu0 %v2077
  %2088 = vmatprep.subr.mxu0 0.0
  %2089 = vmatpush1.msra.mxu0 %v2078
  %2090 = vmatprep.subr.mxu0 0.0
  %2091 = vmatpush1.msra.mxu0 %v2079
  %2092 = vmatprep.subr.mxu0 0.0
  %2093 = vmatpush1.msra.mxu0 0.0
  %2094 = vmatprep.subr.mxu0 0.0
  %2095 = vmatpush1.msra.mxu0 0.0
  %2096 = vmatprep.subr.mxu0 0.0
  %2097 = vmatpush1.msra.mxu0 0.0
  %2098 = vmatprep.subr.mxu0 0.0
  %2099 = vmatpush1.msra.mxu0 0.0
  %2100 = vmatprep.subr.mxu0 0.0
  %2101 = vmatpush1.msra.mxu0 0.0
  %2102 = vmatprep.subr.mxu0 0.0
  %2103 = vmatpush1.msra.mxu0 0.0
  %2104 = vmatprep.subr.mxu0 0.0
  %2105 = vmatpush1.msra.mxu0 0.0
  %2106 = vmatprep.subr.mxu0 0.0
  %2107 = vmatpush1.msra.mxu0 0.0
  %2108 = vmatprep.subr.mxu0 0.0
  %2109 = vmatpush1.msra.mxu0 0.0
  %2110 = vmatprep.subr.mxu0 0.0
  %2111 = vmatpush1.msra.mxu0 0.0
  %2112 = vmatprep.subr.mxu0 0.0
  %2113 = vmatpush1.msra.mxu0 0.0
  %2114 = vmatprep.subr.mxu0 0.0
  %2115 = vmatpush1.msra.mxu0 0.0
  %2116 = vmatprep.subr.mxu0 0.0
  %2117 = vmatpush1.msra.mxu0 0.0
  %2118 = vmatprep.subr.mxu0 0.0
  %2119 = vmatpush1.msra.mxu0 0.0
  %2120 = vmatprep.subr.mxu0 0.0
  %2121 = vmatpush1.msra.mxu0 0.0
  %2122 = vmatprep.subr.mxu0 0.0
  %2123 = vmatpush1.msra.mxu0 0.0
  %2124 = vmatprep.subr.mxu0 0.0
  %2125 = vmatpush1.msra.mxu0 0.0
  %2126 = vmatprep.subr.mxu0 0.0
  %2127 = vmatpush1.msra.mxu0 0.0
  %2128 = vmatprep.subr.mxu0 0.0
  %2129 = vmatpush1.msra.mxu0 0.0
  %2130 = vmatprep.subr.mxu0 0.0
  %2131 = vmatpush1.msra.mxu0 0.0
  %2132 = vmatprep.subr.mxu0 0.0
  %2133 = vmatpush1.msra.mxu0 0.0
  %2134 = vmatprep.subr.mxu0 0.0
  %2135 = vmatpush1.msra.mxu0 0.0
  %2136 = vmatprep.subr.mxu0 0.0
  %2137 = vmatpush1.msra.mxu0 0.0
  %2138 = vmatprep.subr.mxu0 0.0
  %2139 = vmatpush1.msra.mxu0 0.0
  %2140 = vmatprep.subr.mxu0 0.0
  %2141 = vmatpush1.msra.mxu0 0.0
  %2142 = vmatprep.subr.mxu0 0.0
  %2143 = vmatpush1.msra.mxu0 0.0
  %2144 = vmatprep.subr.mxu0 0.0
  %2145 = vmatpush1.msra.mxu0 0.0
  %2146 = vmatprep.subr.mxu0 0.0
  %2147 = vmatpush1.msra.mxu0 0.0
  %2148 = vmatprep.mubr.f32.mxu0 0.0
  %2149 = vmatmul.mubr.f32.gmra.mrb[0].mxu0 %v2082
  %v2150 = vpop.f32.mrb[0].mxu0
  %v2151 = vadd.f32 0.0, %v2150
  %v2152 = vpop.f32.mrb[0].mxu0
  %2153 = vdwg.mxu0
  %v2154 = vld [vmem:[%s20] sm:$0xff]
  %v2155 = vld [vmem:[%s20 + $0x8] sm:$0xff]
  %v2156 = vld [vmem:[%s20 + $0x10] sm:$0xff]
  %v2157 = vld [vmem:[%s20 + $0x18] sm:$0xff]
  %v2158 = vld [vmem:[%s21] sm:$0xff]
  %v2159 = vld [vmem:[%s21 + $0x8] sm:$0xff]
  %v2161 = vsel %vm94, %v2151, 0
  %2163 = vmatprep.subr.mxu0 0.0
  %2164 = vmatpush1.msra.mxu0 %v2158
  %2165 = vmatprep.subr.mxu0 0.0
  %2166 = vmatpush1.msra.mxu0 %v2159
  %2167 = vmatprep.subr.mxu0 0.0
  %2168 = vmatpush1.msra.mxu0 0.0
  %2169 = vmatprep.subr.mxu0 0.0
  %2170 = vmatpush1.msra.mxu0 0.0
  %2171 = vmatprep.subr.mxu0 0.0
  %2172 = vmatpush1.msra.mxu0 0.0
  %2173 = vmatprep.subr.mxu0 0.0
  %2174 = vmatpush1.msra.mxu0 0.0
  %2175 = vmatprep.subr.mxu0 0.0
  %2176 = vmatpush1.msra.mxu0 0.0
  %2177 = vmatprep.subr.mxu0 0.0
  %2178 = vmatpush1.msra.mxu0 0.0
  %2179 = vmatprep.subr.mxu0 0.0
  %2180 = vmatpush1.msra.mxu0 0.0
  %2181 = vmatprep.subr.mxu0 0.0
  %2182 = vmatpush1.msra.mxu0 0.0
  %2183 = vmatprep.subr.mxu0 0.0
  %2184 = vmatpush1.msra.mxu0 0.0
  %2185 = vmatprep.subr.mxu0 0.0
  %2186 = vmatpush1.msra.mxu0 0.0
  %2187 = vmatprep.subr.mxu0 0.0
  %2188 = vmatpush1.msra.mxu0 0.0
  %2189 = vmatprep.subr.mxu0 0.0
  %2190 = vmatpush1.msra.mxu0 0.0
  %2191 = vmatprep.subr.mxu0 0.0
  %2192 = vmatpush1.msra.mxu0 0.0
  %2193 = vmatprep.subr.mxu0 0.0
  %2194 = vmatpush1.msra.mxu0 0.0
  %2195 = vmatprep.subr.mxu0 0.0
  %2196 = vmatpush1.msra.mxu0 0.0
  %2197 = vmatprep.subr.mxu0 0.0
  %2198 = vmatpush1.msra.mxu0 0.0
  %2199 = vmatprep.subr.mxu0 0.0
  %2200 = vmatpush1.msra.mxu0 0.0
  %2201 = vmatprep.subr.mxu0 0.0
  %2202 = vmatpush1.msra.mxu0 0.0
  %2203 = vmatprep.subr.mxu0 0.0
  %2204 = vmatpush1.msra.mxu0 0.0
  %2205 = vmatprep.subr.mxu0 0.0
  %2206 = vmatpush1.msra.mxu0 0.0
  %2207 = vmatprep.subr.mxu0 0.0
  %2208 = vmatpush1.msra.mxu0 0.0
  %2209 = vmatprep.subr.mxu0 0.0
  %2210 = vmatpush1.msra.mxu0 0.0
  %2211 = vmatprep.subr.mxu0 0.0
  %2212 = vmatpush1.msra.mxu0 0.0
  %2213 = vmatprep.subr.mxu0 0.0
  %2214 = vmatpush1.msra.mxu0 0.0
  %2215 = vmatprep.subr.mxu0 0.0
  %2216 = vmatpush1.msra.mxu0 0.0
  %2217 = vmatprep.subr.mxu0 0.0
  %2218 = vmatpush1.msra.mxu0 0.0
  %2219 = vmatprep.subr.mxu0 0.0
  %2220 = vmatpush1.msra.mxu0 0.0
  %2221 = vmatprep.subr.mxu0 0.0
  %2222 = vmatpush1.msra.mxu0 0.0
  %2223 = vmatprep.subr.mxu0 0.0
  %2224 = vmatpush1.msra.mxu0 0.0
  %2225 = vmatprep.subr.mxu0 0.0
  %2226 = vmatpush1.msra.mxu0 0.0
  %2227 = vmatprep.mubr.f32.mxu0 0.0
  %2228 = vmatmul.mubr.f32.gmra.mrb[0].mxu0 %v2161
  %v2229 = vpop.f32.mrb[0].mxu0
  %v2230 = vadd.f32 0.0, %v2229
  %v2231 = vpop.f32.mrb[0].mxu0
  %2232 = vdwg.mxu0
  %v2234 = vsel %vm381, %v1963, 0
  %2236 = vmatprep.subr.mxu0 0.0
  %2237 = vmatpush1.msra.mxu0 %v2154
  %2238 = vmatprep.subr.mxu0 0.0
  %2239 = vmatpush1.msra.mxu0 %v2155
  %2240 = vmatprep.subr.mxu0 0.0
  %2241 = vmatpush1.msra.mxu0 %v2156
  %2242 = vmatprep.subr.mxu0 0.0
  %2243 = vmatpush1.msra.mxu0 %v2157
  %2244 = vmatprep.subr.mxu0 0.0
  %2245 = vmatpush1.msra.mxu0 0.0
  %2246 = vmatprep.subr.mxu0 0.0
  %2247 = vmatpush1.msra.mxu0 0.0
  %2248 = vmatprep.subr.mxu0 0.0
  %2249 = vmatpush1.msra.mxu0 0.0
  %2250 = vmatprep.subr.mxu0 0.0
  %2251 = vmatpush1.msra.mxu0 0.0
  %2252 = vmatprep.subr.mxu0 0.0
  %2253 = vmatpush1.msra.mxu0 0.0
  %2254 = vmatprep.subr.mxu0 0.0
  %2255 = vmatpush1.msra.mxu0 0.0
  %2256 = vmatprep.subr.mxu0 0.0
  %2257 = vmatpush1.msra.mxu0 0.0
  %2258 = vmatprep.subr.mxu0 0.0
  %2259 = vmatpush1.msra.mxu0 0.0
  %2260 = vmatprep.subr.mxu0 0.0
  %2261 = vmatpush1.msra.mxu0 0.0
  %2262 = vmatprep.subr.mxu0 0.0
  %2263 = vmatpush1.msra.mxu0 0.0
  %2264 = vmatprep.subr.mxu0 0.0
  %2265 = vmatpush1.msra.mxu0 0.0
  %2266 = vmatprep.subr.mxu0 0.0
  %2267 = vmatpush1.msra.mxu0 0.0
  %2268 = vmatprep.subr.mxu0 0.0
  %2269 = vmatpush1.msra.mxu0 0.0
  %2270 = vmatprep.subr.mxu0 0.0
  %2271 = vmatpush1.msra.mxu0 0.0
  %2272 = vmatprep.subr.mxu0 0.0
  %2273 = vmatpush1.msra.mxu0 0.0
  %2274 = vmatprep.subr.mxu0 0.0
  %2275 = vmatpush1.msra.mxu0 0.0
  %2276 = vmatprep.subr.mxu0 0.0
  %2277 = vmatpush1.msra.mxu0 0.0
  %2278 = vmatprep.subr.mxu0 0.0
  %2279 = vmatpush1.msra.mxu0 0.0
  %2280 = vmatprep.subr.mxu0 0.0
  %2281 = vmatpush1.msra.mxu0 0.0
  %2282 = vmatprep.subr.mxu0 0.0
  %2283 = vmatpush1.msra.mxu0 0.0
  %2284 = vmatprep.subr.mxu0 0.0
  %2285 = vmatpush1.msra.mxu0 0.0
  %2286 = vmatprep.subr.mxu0 0.0
  %2287 = vmatpush1.msra.mxu0 0.0
  %2288 = vmatprep.subr.mxu0 0.0
  %2289 = vmatpush1.msra.mxu0 0.0
  %2290 = vmatprep.subr.mxu0 0.0
  %2291 = vmatpush1.msra.mxu0 0.0
  %2292 = vmatprep.subr.mxu0 0.0
  %2293 = vmatpush1.msra.mxu0 0.0
  %2294 = vmatprep.subr.mxu0 0.0
  %2295 = vmatpush1.msra.mxu0 0.0
  %2296 = vmatprep.subr.mxu0 0.0
  %2297 = vmatpush1.msra.mxu0 0.0
  %2298 = vmatprep.subr.mxu0 0.0
  %2299 = vmatpush1.msra.mxu0 0.0
  %2300 = vmatprep.mubr.f32.mxu0 0.0
  %2301 = vmatmul.mubr.f32.gmra.mrb[0].mxu0 %v2234
  %v2302 = vpop.f32.mrb[0].mxu0
  %v2303 = vadd.f32 %v2230, %v2302
  %v2304 = vpop.f32.mrb[0].mxu0
  %2305 = vdwg.mxu0
  %v2306 = vld [vmem:[%s22] sm:$0x1]
  %v2308 = vlaneseq
  %v2309 = vshrl.u32 %v2308, 7
  %v2310 = vsub.s32 0, %v2309
  %v2311 = vrot.slane %v2306, %v2310
  %v2313 = vadd.f32 %v2303, %v2311
  %2314 = vst [vmem:[%s23] sm:$0xff] %v2313
  // Predicated region
  $region94: #{model_forward.1} parent=0 // pred_check
    _
  $region95: #{model_forward.1} parent=0 // pred_check_branch
    %2316 = sbr.rel (0) target = $region97
  $region96: #{model_forward.1} parent=0 // pred_region
    _
  $region97: #{model_forward.1} parent=0 // pred_fallthru
    _
  // Predicated region
  $region98: #{model_forward.1} parent=0 // pred_check
    _
  $region99: #{model_forward.1} parent=0 // pred_check_branch
    %2318 = sbr.rel (0) target = $region101
  $region100: #{model_forward.1} parent=0 // pred_region
    _
  $region101: #{model_forward.1} parent=0 // pred_fallthru
    _

</llo_original>
